<compile_context>
chip_gen: v5e
topology: v5e:2x2
jax: 0.10.0
libtpu: 0.0.40
codegen_flags: <defaults>
</compile_context>

<pallas_src>
import math

import jax
import jax.numpy as jnp
from jax import lax
from jax.experimental import pallas as pl
from jax.experimental.pallas import tpu as pltpu

# ----- small config (module defaults are d_model=256, nhead=8, 6 layers) -----
D_MODEL = 64
NHEAD = 4
HEAD_DIM = D_MODEL // NHEAD
DFF = 128
NUM_LAYERS = 2
LN_EPS = 1e-5

# sequence composition (jobs=5 feats, machines=5 feats, operations=9 feats)
N_JOBS, N_MACH, N_OPS = 4, 4, 8
SEQ = N_JOBS + N_MACH + N_OPS

_VMEM_SPEC = pl.BlockSpec(memory_space=pltpu.MemorySpace.VMEM)


# --------------------------- fused kernel ---------------------------

def _layernorm(x, w, b):
    mu = jnp.mean(x, axis=-1, keepdims=True)
    xc = x - mu
    var = jnp.mean(xc * xc, axis=-1, keepdims=True)
    return xc * lax.rsqrt(var + LN_EPS) * w + b


def _forward_kernel(jobs_ref, mach_ref, ops_ref, pe_ref,
                    jw_ref, jb_ref, mw_ref, mb_ref, ow_ref, ob_ref,
                    wqkv_ref, bqkv_ref, wo_ref, bo_ref,
                    ln1w_ref, ln1b_ref, w1_ref, b1_ref, w2_ref, b2_ref,
                    ln2w_ref, ln2b_ref, outw_ref, outb_ref,
                    o_ref, seq_sc, head_sc):
    # --- embeddings, assembled directly into a VMEM scratch (no XLA concat) ---
    seq_sc[0:N_JOBS, :] = (
        jnp.dot(jobs_ref[...], jw_ref[...], preferred_element_type=jnp.float32)
        + jb_ref[...])
    seq_sc[N_JOBS:N_JOBS + N_MACH, :] = (
        jnp.dot(mach_ref[...], mw_ref[...], preferred_element_type=jnp.float32)
        + mb_ref[...])
    seq_sc[N_JOBS + N_MACH:SEQ, :] = (
        jnp.dot(ops_ref[...], ow_ref[...], preferred_element_type=jnp.float32)
        + ob_ref[...])
    x = seq_sc[...] + pe_ref[...]                          # (S, d_model)

    # --- encoder layers (statically unrolled; post-norm, ReLU FFN) ---
    for l in range(NUM_LAYERS):
        # self-attention: one fused QKV matmul (1/sqrt(hd) folded into Wq/bq)
        qkv = (jnp.dot(x, wqkv_ref[l], preferred_element_type=jnp.float32)
               + bqkv_ref[l])                              # (S, 3*d_model)
        for h in range(NHEAD):
            q = qkv[:, h * HEAD_DIM:(h + 1) * HEAD_DIM]
            k = qkv[:, D_MODEL + h * HEAD_DIM:D_MODEL + (h + 1) * HEAD_DIM]
            v = qkv[:, 2 * D_MODEL + h * HEAD_DIM:2 * D_MODEL + (h + 1) * HEAD_DIM]
            s = lax.dot_general(q, k, (((1,), (1,)), ((), ())),
                                preferred_element_type=jnp.float32)   # (S, S)
            s = s - jnp.max(s, axis=-1, keepdims=True)
            p = jnp.exp(s)
            p = p / jnp.sum(p, axis=-1, keepdims=True)
            head_sc[:, h * HEAD_DIM:(h + 1) * HEAD_DIM] = jnp.dot(
                p, v, preferred_element_type=jnp.float32)             # (S, hd)
        attn = (jnp.dot(head_sc[...], wo_ref[l],
                        preferred_element_type=jnp.float32) + bo_ref[l])
        x = _layernorm(x + attn, ln1w_ref[l], ln1b_ref[l])

        # feed-forward (ReLU)
        ff = jnp.dot(x, w1_ref[l], preferred_element_type=jnp.float32) + b1_ref[l]
        ff = jnp.maximum(ff, 0.0)
        ff = jnp.dot(ff, w2_ref[l], preferred_element_type=jnp.float32) + b2_ref[l]
        x = _layernorm(x + ff, ln2w_ref[l], ln2b_ref[l])

    # --- output projection to 1 ---
    o_ref[...] = (jnp.dot(x, outw_ref[...], preferred_element_type=jnp.float32)
                  + outb_ref[...])


# --------------------------- wrapper ---------------------------

def scheduling_transformer_forward(params, jobs, machines, operations, pe):
    args = (jobs, machines, operations, pe,
            params["job_w"], params["job_b"],
            params["mach_w"], params["mach_b"],
            params["op_w"], params["op_b"],
            params["wqkv"], params["bqkv"], params["wo"], params["bo"],
            params["ln1w"], params["ln1b"], params["w1"], params["b1"],
            params["w2"], params["b2"], params["ln2w"], params["ln2b"],
            params["out_w"], params["out_b"])
    return pl.pallas_call(
        _forward_kernel,
        out_shape=jax.ShapeDtypeStruct((SEQ, 1), jnp.float32),
        in_specs=[_VMEM_SPEC] * len(args),
        out_specs=_VMEM_SPEC,
        scratch_shapes=[pltpu.VMEM((SEQ, D_MODEL), jnp.float32),   # seq assembly
                        pltpu.VMEM((SEQ, D_MODEL), jnp.float32)],  # head staging
    )(*args)


# --------------------------- params / PE ---------------------------

def positional_encoding(max_len, d_model):
    position = jnp.arange(max_len, dtype=jnp.float32)[:, None]
    div_term = jnp.exp(jnp.arange(0, d_model, 2, dtype=jnp.float32)
                       * (-math.log(10000.0) / d_model))
    pe = jnp.zeros((max_len, d_model), jnp.float32)
    pe = pe.at[:, 0::2].set(jnp.sin(position * div_term))
    pe = pe.at[:, 1::2].set(jnp.cos(position * div_term))
    return pe


def init_params(key):
    def dense(k, fan_in, fan_out):
        # deterministic uniform init (torch-Linear-style bound)
        bound = 1.0 / math.sqrt(fan_in)
        kw, kb = jax.random.split(k)
        w_t = jax.random.uniform(kw, (fan_in, fan_out), jnp.float32, -bound, bound)
        b = jax.random.uniform(kb, (1, fan_out), jnp.float32, -bound, bound)
        return w_t, b

    keys = jax.random.split(key, 4 + NUM_LAYERS)
    params = {}
    params["job_w"], params["job_b"] = dense(keys[0], 5, D_MODEL)
    params["mach_w"], params["mach_b"] = dense(keys[1], 5, D_MODEL)
    params["op_w"], params["op_b"] = dense(keys[2], 9, D_MODEL)
    params["out_w"], params["out_b"] = dense(keys[3], D_MODEL, 1)

    scale = 1.0 / math.sqrt(HEAD_DIM)   # folded into the query projection
    acc = {k: [] for k in ("wqkv", "bqkv", "wo", "bo", "ln1w", "ln1b",
                           "w1", "b1", "w2", "b2", "ln2w", "ln2b")}
    for i in range(NUM_LAYERS):
        lk = jax.random.split(keys[4 + i], 6)
        wq_t, bq = dense(lk[0], D_MODEL, D_MODEL)
        wk_t, bk = dense(lk[1], D_MODEL, D_MODEL)
        wv_t, bv = dense(lk[2], D_MODEL, D_MODEL)
        wo_t, bo = dense(lk[3], D_MODEL, D_MODEL)
        w1_t, b1 = dense(lk[4], D_MODEL, DFF)
        w2_t, b2 = dense(lk[5], DFF, D_MODEL)
        # fused QKV weight/bias, columns laid out [q | k | v], heads contiguous
        acc["wqkv"].append(jnp.concatenate([wq_t * scale, wk_t, wv_t], axis=1))
        acc["bqkv"].append(jnp.concatenate([bq * scale, bk, bv], axis=1))
        acc["wo"].append(wo_t)
        acc["bo"].append(bo)
        acc["ln1w"].append(jnp.ones((1, D_MODEL), jnp.float32))
        acc["ln1b"].append(jnp.zeros((1, D_MODEL), jnp.float32))
        acc["w1"].append(w1_t)
        acc["b1"].append(b1)
        acc["w2"].append(w2_t)
        acc["b2"].append(b2)
        acc["ln2w"].append(jnp.ones((1, D_MODEL), jnp.float32))
        acc["ln2b"].append(jnp.zeros((1, D_MODEL), jnp.float32))
    for k, v in acc.items():
        params[k] = jnp.stack(v, axis=0)   # leading layer axis
    return params


if __name__ == "__main__":
    key = jax.random.PRNGKey(0)
    k_p, k_j, k_m, k_o = jax.random.split(key, 4)

    params = init_params(k_p)
    pe = positional_encoding(SEQ, D_MODEL)

    jobs = jax.random.normal(k_j, (N_JOBS, 5), jnp.float32)
    machines = jax.random.normal(k_m, (N_MACH, 5), jnp.float32)
    operations = jax.random.normal(k_o, (N_OPS, 9), jnp.float32)

    fwd = jax.jit(scheduling_transformer_forward)
    out = fwd(params, jobs, machines, operations, pe)
    jax.block_until_ready(out)
    assert out.shape == (SEQ, 1), out.shape
    print("KERNEL_OK")
</pallas_src>

<mosaic_0001>
module attributes {stable_mosaic.version = 11 : i64} {
  func.func @_forward_kernel(%arg0: memref<4x5xf32, #tpu.memory_space<vmem>>, %arg1: memref<4x5xf32, #tpu.memory_space<vmem>>, %arg2: memref<8x9xf32, #tpu.memory_space<vmem>>, %arg3: memref<16x64xf32, #tpu.memory_space<vmem>>, %arg4: memref<5x64xf32, #tpu.memory_space<vmem>>, %arg5: memref<1x64xf32, #tpu.memory_space<vmem>>, %arg6: memref<5x64xf32, #tpu.memory_space<vmem>>, %arg7: memref<1x64xf32, #tpu.memory_space<vmem>>, %arg8: memref<9x64xf32, #tpu.memory_space<vmem>>, %arg9: memref<1x64xf32, #tpu.memory_space<vmem>>, %arg10: memref<2x64x192xf32, #tpu.memory_space<vmem>>, %arg11: memref<2x1x192xf32, #tpu.memory_space<vmem>>, %arg12: memref<2x64x64xf32, #tpu.memory_space<vmem>>, %arg13: memref<2x1x64xf32, #tpu.memory_space<vmem>>, %arg14: memref<2x1x64xf32, #tpu.memory_space<vmem>>, %arg15: memref<2x1x64xf32, #tpu.memory_space<vmem>>, %arg16: memref<2x64x128xf32, #tpu.memory_space<vmem>>, %arg17: memref<2x1x128xf32, #tpu.memory_space<vmem>>, %arg18: memref<2x128x64xf32, #tpu.memory_space<vmem>>, %arg19: memref<2x1x64xf32, #tpu.memory_space<vmem>>, %arg20: memref<2x1x64xf32, #tpu.memory_space<vmem>>, %arg21: memref<2x1x64xf32, #tpu.memory_space<vmem>>, %arg22: memref<64x1xf32, #tpu.memory_space<vmem>>, %arg23: memref<1x1xf32, #tpu.memory_space<vmem>>, %arg24: memref<16x1xf32, #tpu.memory_space<vmem>>, %arg25: memref<16x64xf32, #tpu.memory_space<vmem>>, %arg26: memref<16x64xf32, #tpu.memory_space<vmem>>) attributes {dimension_semantics = [], scalar_prefetch = 0 : i64, scratch_operands = 2 : i64, tpu.core_type = #tpu.core_type<tc>} {
    %c0 = arith.constant 0 : index
    %c0_0 = arith.constant 0 : index
    %0 = vector.load %arg0[%c0, %c0_0] : memref<4x5xf32, #tpu.memory_space<vmem>>, vector<4x5xf32>
    %c0_1 = arith.constant 0 : index
    %c0_2 = arith.constant 0 : index
    %1 = vector.load %arg4[%c0_1, %c0_2] : memref<5x64xf32, #tpu.memory_space<vmem>>, vector<5x64xf32>
    %cst = arith.constant dense<0.000000e+00> : vector<4x64xf32>
    %2 = tpu.matmul %0, %1, %cst {dimension_numbers = #tpu.dot_dimension_numbers<[1], [0], [0], [1], [0, 0, 1, 1], [], []>} : vector<4x5xf32>, vector<5x64xf32>, vector<4x64xf32> -> vector<4x64xf32>
    %c0_3 = arith.constant 0 : index
    %c0_4 = arith.constant 0 : index
    %3 = vector.load %arg5[%c0_3, %c0_4] : memref<1x64xf32, #tpu.memory_space<vmem>>, vector<1x64xf32>
    %4 = vector.broadcast %3 : vector<1x64xf32> to vector<4x64xf32>
    %5 = arith.addf %2, %4 : vector<4x64xf32>
    %c0_5 = arith.constant 0 : index
    %c0_6 = arith.constant 0 : index
    %6 = vector.load %arg25[%c0_5, %c0_6] : memref<16x64xf32, #tpu.memory_space<vmem>>, vector<4x64xf32>
    tpu.vector_store %arg25[%c0_5, %c0_6], %5 {strides = array<i32>} : memref<16x64xf32, #tpu.memory_space<vmem>>, vector<4x64xf32>,
    %c0_7 = arith.constant 0 : index
    %c0_8 = arith.constant 0 : index
    %7 = vector.load %arg1[%c0_7, %c0_8] : memref<4x5xf32, #tpu.memory_space<vmem>>, vector<4x5xf32>
    %c0_9 = arith.constant 0 : index
    %c0_10 = arith.constant 0 : index
    %8 = vector.load %arg6[%c0_9, %c0_10] : memref<5x64xf32, #tpu.memory_space<vmem>>, vector<5x64xf32>
    %cst_11 = arith.constant dense<0.000000e+00> : vector<4x64xf32>
    %9 = tpu.matmul %7, %8, %cst_11 {dimension_numbers = #tpu.dot_dimension_numbers<[1], [0], [0], [1], [0, 0, 1, 1], [], []>} : vector<4x5xf32>, vector<5x64xf32>, vector<4x64xf32> -> vector<4x64xf32>
    %c0_12 = arith.constant 0 : index
    %c0_13 = arith.constant 0 : index
    %10 = vector.load %arg7[%c0_12, %c0_13] : memref<1x64xf32, #tpu.memory_space<vmem>>, vector<1x64xf32>
    %11 = vector.broadcast %10 : vector<1x64xf32> to vector<4x64xf32>
    %12 = arith.addf %9, %11 : vector<4x64xf32>
    %c4 = arith.constant 4 : index
    %c0_14 = arith.constant 0 : index
    %13 = vector.load %arg25[%c4, %c0_14] : memref<16x64xf32, #tpu.memory_space<vmem>>, vector<4x64xf32>
    tpu.vector_store %arg25[%c4, %c0_14], %12 {strides = array<i32>} : memref<16x64xf32, #tpu.memory_space<vmem>>, vector<4x64xf32>,
    %c0_15 = arith.constant 0 : index
    %c0_16 = arith.constant 0 : index
    %14 = vector.load %arg2[%c0_15, %c0_16] : memref<8x9xf32, #tpu.memory_space<vmem>>, vector<8x9xf32>
    %c0_17 = arith.constant 0 : index
    %c0_18 = arith.constant 0 : index
    %15 = vector.load %arg8[%c0_17, %c0_18] : memref<9x64xf32, #tpu.memory_space<vmem>>, vector<9x64xf32>
    %cst_19 = arith.constant dense<0.000000e+00> : vector<8x64xf32>
    %16 = tpu.matmul %14, %15, %cst_19 {dimension_numbers = #tpu.dot_dimension_numbers<[1], [0], [0], [1], [0, 0, 1, 1], [], []>} : vector<8x9xf32>, vector<9x64xf32>, vector<8x64xf32> -> vector<8x64xf32>
    %c0_20 = arith.constant 0 : index
    %c0_21 = arith.constant 0 : index
    %17 = vector.load %arg9[%c0_20, %c0_21] : memref<1x64xf32, #tpu.memory_space<vmem>>, vector<1x64xf32>
    %18 = vector.broadcast %17 : vector<1x64xf32> to vector<8x64xf32>
    %19 = arith.addf %16, %18 : vector<8x64xf32>
    %c8 = arith.constant 8 : index
    %c0_22 = arith.constant 0 : index
    %20 = vector.load %arg25[%c8, %c0_22] : memref<16x64xf32, #tpu.memory_space<vmem>>, vector<8x64xf32>
    tpu.vector_store %arg25[%c8, %c0_22], %19 {strides = array<i32>} : memref<16x64xf32, #tpu.memory_space<vmem>>, vector<8x64xf32>,
    %c0_23 = arith.constant 0 : index
    %c0_24 = arith.constant 0 : index
    %21 = vector.load %arg25[%c0_23, %c0_24] : memref<16x64xf32, #tpu.memory_space<vmem>>, vector<16x64xf32>
    %c0_25 = arith.constant 0 : index
    %c0_26 = arith.constant 0 : index
    %22 = vector.load %arg3[%c0_25, %c0_26] : memref<16x64xf32, #tpu.memory_space<vmem>>, vector<16x64xf32>
    %23 = arith.addf %21, %22 : vector<16x64xf32>
    %c0_27 = arith.constant 0 : index
    %c0_28 = arith.constant 0 : index
    %c0_29 = arith.constant 0 : index
    %24 = vector.load %arg10[%c0_27, %c0_28, %c0_29] : memref<2x64x192xf32, #tpu.memory_space<vmem>>, vector<1x64x192xf32>
    %25 = vector.shape_cast %24 : vector<1x64x192xf32> to vector<64x192xf32>
    %cst_30 = arith.constant dense<0.000000e+00> : vector<16x192xf32>
    %26 = tpu.matmul %23, %25, %cst_30 {dimension_numbers = #tpu.dot_dimension_numbers<[1], [0], [0], [1], [0, 0, 1, 1], [], []>} : vector<16x64xf32>, vector<64x192xf32>, vector<16x192xf32> -> vector<16x192xf32>
    %c0_31 = arith.constant 0 : index
    %c0_32 = arith.constant 0 : index
    %c0_33 = arith.constant 0 : index
    %27 = vector.load %arg11[%c0_31, %c0_32, %c0_33] : memref<2x1x192xf32, #tpu.memory_space<vmem>>, vector<1x1x192xf32>
    %28 = vector.shape_cast %27 : vector<1x1x192xf32> to vector<1x192xf32>
    %29 = vector.broadcast %28 : vector<1x192xf32> to vector<16x192xf32>
    %30 = arith.addf %26, %29 : vector<16x192xf32>
    %31 = vector.extract_strided_slice %30 {offsets = [0, 0], sizes = [16, 16], strides = [1, 1]} : vector<16x192xf32> to vector<16x16xf32>
    %32 = vector.extract_strided_slice %30 {offsets = [0, 64], sizes = [16, 16], strides = [1, 1]} : vector<16x192xf32> to vector<16x16xf32>
    %33 = vector.extract_strided_slice %30 {offsets = [0, 128], sizes = [16, 16], strides = [1, 1]} : vector<16x192xf32> to vector<16x16xf32>
    %cst_34 = arith.constant dense<0.000000e+00> : vector<16x16xf32>
    %34 = tpu.matmul %31, %32, %cst_34 {dimension_numbers = #tpu.dot_dimension_numbers<[1], [1], [0], [0], [0, 0, 1, 0], [], []>} : vector<16x16xf32>, vector<16x16xf32>, vector<16x16xf32> -> vector<16x16xf32>
    %cst_35 = arith.constant dense<0xFF800000> : vector<16xf32>
    %35 = vector.multi_reduction <maximumf>, %34, %cst_35 [1] : vector<16x16xf32> to vector<16xf32>
    %36 = vector.shape_cast %35 : vector<16xf32> to vector<16x1xf32>
    %37 = vector.broadcast %36 : vector<16x1xf32> to vector<16x16xf32>
    %38 = arith.subf %34, %37 : vector<16x16xf32>
    %39 = math.exp %38 : vector<16x16xf32>
    %cst_36 = arith.constant dense<0.000000e+00> : vector<16xf32>
    %40 = vector.multi_reduction <add>, %39, %cst_36 [1] : vector<16x16xf32> to vector<16xf32>
    %41 = vector.shape_cast %40 : vector<16xf32> to vector<16x1xf32>
    %42 = vector.broadcast %41 : vector<16x1xf32> to vector<16x16xf32>
    %43 = arith.divf %39, %42 : vector<16x16xf32>
    %cst_37 = arith.constant dense<0.000000e+00> : vector<16x16xf32>
    %44 = tpu.matmul %43, %33, %cst_37 {dimension_numbers = #tpu.dot_dimension_numbers<[1], [0], [0], [1], [0, 0, 1, 1], [], []>} : vector<16x16xf32>, vector<16x16xf32>, vector<16x16xf32> -> vector<16x16xf32>
    %c0_38 = arith.constant 0 : index
    %c0_39 = arith.constant 0 : index
    %45 = vector.load %arg26[%c0_38, %c0_39] : memref<16x64xf32, #tpu.memory_space<vmem>>, vector<16x16xf32>
    tpu.vector_store %arg26[%c0_38, %c0_39], %44 {strides = array<i32>} : memref<16x64xf32, #tpu.memory_space<vmem>>, vector<16x16xf32>,
    %46 = vector.extract_strided_slice %30 {offsets = [0, 16], sizes = [16, 16], strides = [1, 1]} : vector<16x192xf32> to vector<16x16xf32>
    %47 = vector.extract_strided_slice %30 {offsets = [0, 80], sizes = [16, 16], strides = [1, 1]} : vector<16x192xf32> to vector<16x16xf32>
    %48 = vector.extract_strided_slice %30 {offsets = [0, 144], sizes = [16, 16], strides = [1, 1]} : vector<16x192xf32> to vector<16x16xf32>
    %cst_40 = arith.constant dense<0.000000e+00> : vector<16x16xf32>
    %49 = tpu.matmul %46, %47, %cst_40 {dimension_numbers = #tpu.dot_dimension_numbers<[1], [1], [0], [0], [0, 0, 1, 0], [], []>} : vector<16x16xf32>, vector<16x16xf32>, vector<16x16xf32> -> vector<16x16xf32>
    %cst_41 = arith.constant dense<0xFF800000> : vector<16xf32>
    %50 = vector.multi_reduction <maximumf>, %49, %cst_41 [1] : vector<16x16xf32> to vector<16xf32>
    %51 = vector.shape_cast %50 : vector<16xf32> to vector<16x1xf32>
    %52 = vector.broadcast %51 : vector<16x1xf32> to vector<16x16xf32>
    %53 = arith.subf %49, %52 : vector<16x16xf32>
    %54 = math.exp %53 : vector<16x16xf32>
    %cst_42 = arith.constant dense<0.000000e+00> : vector<16xf32>
    %55 = vector.multi_reduction <add>, %54, %cst_42 [1] : vector<16x16xf32> to vector<16xf32>
    %56 = vector.shape_cast %55 : vector<16xf32> to vector<16x1xf32>
    %57 = vector.broadcast %56 : vector<16x1xf32> to vector<16x16xf32>
    %58 = arith.divf %54, %57 : vector<16x16xf32>
    %cst_43 = arith.constant dense<0.000000e+00> : vector<16x16xf32>
    %59 = tpu.matmul %58, %48, %cst_43 {dimension_numbers = #tpu.dot_dimension_numbers<[1], [0], [0], [1], [0, 0, 1, 1], [], []>} : vector<16x16xf32>, vector<16x16xf32>, vector<16x16xf32> -> vector<16x16xf32>
    %c0_44 = arith.constant 0 : index
    %c16 = arith.constant 16 : index
    %60 = vector.load %arg26[%c0_44, %c16] : memref<16x64xf32, #tpu.memory_space<vmem>>, vector<16x16xf32>
    tpu.vector_store %arg26[%c0_44, %c16], %59 {strides = array<i32>} : memref<16x64xf32, #tpu.memory_space<vmem>>, vector<16x16xf32>,
    %61 = vector.extract_strided_slice %30 {offsets = [0, 32], sizes = [16, 16], strides = [1, 1]} : vector<16x192xf32> to vector<16x16xf32>
    %62 = vector.extract_strided_slice %30 {offsets = [0, 96], sizes = [16, 16], strides = [1, 1]} : vector<16x192xf32> to vector<16x16xf32>
    %63 = vector.extract_strided_slice %30 {offsets = [0, 160], sizes = [16, 16], strides = [1, 1]} : vector<16x192xf32> to vector<16x16xf32>
    %cst_45 = arith.constant dense<0.000000e+00> : vector<16x16xf32>
    %64 = tpu.matmul %61, %62, %cst_45 {dimension_numbers = #tpu.dot_dimension_numbers<[1], [1], [0], [0], [0, 0, 1, 0], [], []>} : vector<16x16xf32>, vector<16x16xf32>, vector<16x16xf32> -> vector<16x16xf32>
    %cst_46 = arith.constant dense<0xFF800000> : vector<16xf32>
    %65 = vector.multi_reduction <maximumf>, %64, %cst_46 [1] : vector<16x16xf32> to vector<16xf32>
    %66 = vector.shape_cast %65 : vector<16xf32> to vector<16x1xf32>
    %67 = vector.broadcast %66 : vector<16x1xf32> to vector<16x16xf32>
    %68 = arith.subf %64, %67 : vector<16x16xf32>
    %69 = math.exp %68 : vector<16x16xf32>
    %cst_47 = arith.constant dense<0.000000e+00> : vector<16xf32>
    %70 = vector.multi_reduction <add>, %69, %cst_47 [1] : vector<16x16xf32> to vector<16xf32>
    %71 = vector.shape_cast %70 : vector<16xf32> to vector<16x1xf32>
    %72 = vector.broadcast %71 : vector<16x1xf32> to vector<16x16xf32>
    %73 = arith.divf %69, %72 : vector<16x16xf32>
    %cst_48 = arith.constant dense<0.000000e+00> : vector<16x16xf32>
    %74 = tpu.matmul %73, %63, %cst_48 {dimension_numbers = #tpu.dot_dimension_numbers<[1], [0], [0], [1], [0, 0, 1, 1], [], []>} : vector<16x16xf32>, vector<16x16xf32>, vector<16x16xf32> -> vector<16x16xf32>
    %c0_49 = arith.constant 0 : index
    %c32 = arith.constant 32 : index
    %75 = vector.load %arg26[%c0_49, %c32] : memref<16x64xf32, #tpu.memory_space<vmem>>, vector<16x16xf32>
    tpu.vector_store %arg26[%c0_49, %c32], %74 {strides = array<i32>} : memref<16x64xf32, #tpu.memory_space<vmem>>, vector<16x16xf32>,
    %76 = vector.extract_strided_slice %30 {offsets = [0, 48], sizes = [16, 16], strides = [1, 1]} : vector<16x192xf32> to vector<16x16xf32>
    %77 = vector.extract_strided_slice %30 {offsets = [0, 112], sizes = [16, 16], strides = [1, 1]} : vector<16x192xf32> to vector<16x16xf32>
    %78 = vector.extract_strided_slice %30 {offsets = [0, 176], sizes = [16, 16], strides = [1, 1]} : vector<16x192xf32> to vector<16x16xf32>
    %cst_50 = arith.constant dense<0.000000e+00> : vector<16x16xf32>
    %79 = tpu.matmul %76, %77, %cst_50 {dimension_numbers = #tpu.dot_dimension_numbers<[1], [1], [0], [0], [0, 0, 1, 0], [], []>} : vector<16x16xf32>, vector<16x16xf32>, vector<16x16xf32> -> vector<16x16xf32>
    %cst_51 = arith.constant dense<0xFF800000> : vector<16xf32>
    %80 = vector.multi_reduction <maximumf>, %79, %cst_51 [1] : vector<16x16xf32> to vector<16xf32>
    %81 = vector.shape_cast %80 : vector<16xf32> to vector<16x1xf32>
    %82 = vector.broadcast %81 : vector<16x1xf32> to vector<16x16xf32>
    %83 = arith.subf %79, %82 : vector<16x16xf32>
    %84 = math.exp %83 : vector<16x16xf32>
    %cst_52 = arith.constant dense<0.000000e+00> : vector<16xf32>
    %85 = vector.multi_reduction <add>, %84, %cst_52 [1] : vector<16x16xf32> to vector<16xf32>
    %86 = vector.shape_cast %85 : vector<16xf32> to vector<16x1xf32>
    %87 = vector.broadcast %86 : vector<16x1xf32> to vector<16x16xf32>
    %88 = arith.divf %84, %87 : vector<16x16xf32>
    %cst_53 = arith.constant dense<0.000000e+00> : vector<16x16xf32>
    %89 = tpu.matmul %88, %78, %cst_53 {dimension_numbers = #tpu.dot_dimension_numbers<[1], [0], [0], [1], [0, 0, 1, 1], [], []>} : vector<16x16xf32>, vector<16x16xf32>, vector<16x16xf32> -> vector<16x16xf32>
    %c0_54 = arith.constant 0 : index
    %c48 = arith.constant 48 : index
    %90 = vector.load %arg26[%c0_54, %c48] : memref<16x64xf32, #tpu.memory_space<vmem>>, vector<16x16xf32>
    tpu.vector_store %arg26[%c0_54, %c48], %89 {strides = array<i32>} : memref<16x64xf32, #tpu.memory_space<vmem>>, vector<16x16xf32>,
    %c0_55 = arith.constant 0 : index
    %c0_56 = arith.constant 0 : index
    %91 = vector.load %arg26[%c0_55, %c0_56] : memref<16x64xf32, #tpu.memory_space<vmem>>, vector<16x64xf32>
    %c0_57 = arith.constant 0 : index
    %c0_58 = arith.constant 0 : index
    %c0_59 = arith.constant 0 : index
    %92 = vector.load %arg12[%c0_57, %c0_58, %c0_59] : memref<2x64x64xf32, #tpu.memory_space<vmem>>, vector<1x64x64xf32>
    %93 = vector.shape_cast %92 : vector<1x64x64xf32> to vector<64x64xf32>
    %cst_60 = arith.constant dense<0.000000e+00> : vector<16x64xf32>
    %94 = tpu.matmul %91, %93, %cst_60 {dimension_numbers = #tpu.dot_dimension_numbers<[1], [0], [0], [1], [0, 0, 1, 1], [], []>} : vector<16x64xf32>, vector<64x64xf32>, vector<16x64xf32> -> vector<16x64xf32>
    %c0_61 = arith.constant 0 : index
    %c0_62 = arith.constant 0 : index
    %c0_63 = arith.constant 0 : index
    %95 = vector.load %arg13[%c0_61, %c0_62, %c0_63] : memref<2x1x64xf32, #tpu.memory_space<vmem>>, vector<1x1x64xf32>
    %96 = vector.shape_cast %95 : vector<1x1x64xf32> to vector<1x64xf32>
    %97 = vector.broadcast %96 : vector<1x64xf32> to vector<16x64xf32>
    %98 = arith.addf %94, %97 : vector<16x64xf32>
    %99 = arith.addf %23, %98 : vector<16x64xf32>
    %c0_64 = arith.constant 0 : index
    %c0_65 = arith.constant 0 : index
    %c0_66 = arith.constant 0 : index
    %100 = vector.load %arg14[%c0_64, %c0_65, %c0_66] : memref<2x1x64xf32, #tpu.memory_space<vmem>>, vector<1x1x64xf32>
    %101 = vector.shape_cast %100 : vector<1x1x64xf32> to vector<1x64xf32>
    %c0_67 = arith.constant 0 : index
    %c0_68 = arith.constant 0 : index
    %c0_69 = arith.constant 0 : index
    %102 = vector.load %arg15[%c0_67, %c0_68, %c0_69] : memref<2x1x64xf32, #tpu.memory_space<vmem>>, vector<1x1x64xf32>
    %103 = vector.shape_cast %102 : vector<1x1x64xf32> to vector<1x64xf32>
    %cst_70 = arith.constant dense<0.000000e+00> : vector<16xf32>
    %104 = vector.multi_reduction <add>, %99, %cst_70 [1] : vector<16x64xf32> to vector<16xf32>
    %105 = vector.shape_cast %104 : vector<16xf32> to vector<16x1xf32>
    %cst_71 = arith.constant 6.400000e+01 : f32
    %106 = vector.broadcast %cst_71 : f32 to vector<16x1xf32>
    %107 = arith.divf %105, %106 : vector<16x1xf32>
    %108 = vector.broadcast %107 : vector<16x1xf32> to vector<16x64xf32>
    %109 = arith.subf %99, %108 : vector<16x64xf32>
    %110 = arith.mulf %109, %109 : vector<16x64xf32>
    %cst_72 = arith.constant dense<0.000000e+00> : vector<16xf32>
    %111 = vector.multi_reduction <add>, %110, %cst_72 [1] : vector<16x64xf32> to vector<16xf32>
    %112 = vector.shape_cast %111 : vector<16xf32> to vector<16x1xf32>
    %cst_73 = arith.constant 6.400000e+01 : f32
    %113 = vector.broadcast %cst_73 : f32 to vector<16x1xf32>
    %114 = arith.divf %112, %113 : vector<16x1xf32>
    %cst_74 = arith.constant 9.99999974E-6 : f32
    %115 = vector.broadcast %cst_74 : f32 to vector<16x1xf32>
    %116 = arith.addf %114, %115 : vector<16x1xf32>
    %117 = math.rsqrt %116 : vector<16x1xf32>
    %118 = vector.broadcast %117 : vector<16x1xf32> to vector<16x64xf32>
    %119 = arith.mulf %109, %118 : vector<16x64xf32>
    %120 = vector.broadcast %101 : vector<1x64xf32> to vector<16x64xf32>
    %121 = arith.mulf %119, %120 : vector<16x64xf32>
    %122 = vector.broadcast %103 : vector<1x64xf32> to vector<16x64xf32>
    %123 = arith.addf %121, %122 : vector<16x64xf32>
    %c0_75 = arith.constant 0 : index
    %c0_76 = arith.constant 0 : index
    %c0_77 = arith.constant 0 : index
    %124 = vector.load %arg16[%c0_75, %c0_76, %c0_77] : memref<2x64x128xf32, #tpu.memory_space<vmem>>, vector<1x64x128xf32>
    %125 = vector.shape_cast %124 : vector<1x64x128xf32> to vector<64x128xf32>
    %cst_78 = arith.constant dense<0.000000e+00> : vector<16x128xf32>
    %126 = tpu.matmul %123, %125, %cst_78 {dimension_numbers = #tpu.dot_dimension_numbers<[1], [0], [0], [1], [0, 0, 1, 1], [], []>} : vector<16x64xf32>, vector<64x128xf32>, vector<16x128xf32> -> vector<16x128xf32>
    %c0_79 = arith.constant 0 : index
    %c0_80 = arith.constant 0 : index
    %c0_81 = arith.constant 0 : index
    %127 = vector.load %arg17[%c0_79, %c0_80, %c0_81] : memref<2x1x128xf32, #tpu.memory_space<vmem>>, vector<1x1x128xf32>
    %128 = vector.shape_cast %127 : vector<1x1x128xf32> to vector<1x128xf32>
    %129 = vector.broadcast %128 : vector<1x128xf32> to vector<16x128xf32>
    %130 = arith.addf %126, %129 : vector<16x128xf32>
    %cst_82 = arith.constant 0.000000e+00 : f32
    %131 = vector.broadcast %cst_82 : f32 to vector<16x128xf32>
    %132 = arith.maximumf %130, %131 : vector<16x128xf32>
    %c0_83 = arith.constant 0 : index
    %c0_84 = arith.constant 0 : index
    %c0_85 = arith.constant 0 : index
    %133 = vector.load %arg18[%c0_83, %c0_84, %c0_85] : memref<2x128x64xf32, #tpu.memory_space<vmem>>, vector<1x128x64xf32>
    %134 = vector.shape_cast %133 : vector<1x128x64xf32> to vector<128x64xf32>
    %cst_86 = arith.constant dense<0.000000e+00> : vector<16x64xf32>
    %135 = tpu.matmul %132, %134, %cst_86 {dimension_numbers = #tpu.dot_dimension_numbers<[1], [0], [0], [1], [0, 0, 1, 1], [], []>} : vector<16x128xf32>, vector<128x64xf32>, vector<16x64xf32> -> vector<16x64xf32>
    %c0_87 = arith.constant 0 : index
    %c0_88 = arith.constant 0 : index
    %c0_89 = arith.constant 0 : index
    %136 = vector.load %arg19[%c0_87, %c0_88, %c0_89] : memref<2x1x64xf32, #tpu.memory_space<vmem>>, vector<1x1x64xf32>
    %137 = vector.shape_cast %136 : vector<1x1x64xf32> to vector<1x64xf32>
    %138 = vector.broadcast %137 : vector<1x64xf32> to vector<16x64xf32>
    %139 = arith.addf %135, %138 : vector<16x64xf32>
    %140 = arith.addf %123, %139 : vector<16x64xf32>
    %c0_90 = arith.constant 0 : index
    %c0_91 = arith.constant 0 : index
    %c0_92 = arith.constant 0 : index
    %141 = vector.load %arg20[%c0_90, %c0_91, %c0_92] : memref<2x1x64xf32, #tpu.memory_space<vmem>>, vector<1x1x64xf32>
    %142 = vector.shape_cast %141 : vector<1x1x64xf32> to vector<1x64xf32>
    %c0_93 = arith.constant 0 : index
    %c0_94 = arith.constant 0 : index
    %c0_95 = arith.constant 0 : index
    %143 = vector.load %arg21[%c0_93, %c0_94, %c0_95] : memref<2x1x64xf32, #tpu.memory_space<vmem>>, vector<1x1x64xf32>
    %144 = vector.shape_cast %143 : vector<1x1x64xf32> to vector<1x64xf32>
    %cst_96 = arith.constant dense<0.000000e+00> : vector<16xf32>
    %145 = vector.multi_reduction <add>, %140, %cst_96 [1] : vector<16x64xf32> to vector<16xf32>
    %146 = vector.shape_cast %145 : vector<16xf32> to vector<16x1xf32>
    %cst_97 = arith.constant 6.400000e+01 : f32
    %147 = vector.broadcast %cst_97 : f32 to vector<16x1xf32>
    %148 = arith.divf %146, %147 : vector<16x1xf32>
    %149 = vector.broadcast %148 : vector<16x1xf32> to vector<16x64xf32>
    %150 = arith.subf %140, %149 : vector<16x64xf32>
    %151 = arith.mulf %150, %150 : vector<16x64xf32>
    %cst_98 = arith.constant dense<0.000000e+00> : vector<16xf32>
    %152 = vector.multi_reduction <add>, %151, %cst_98 [1] : vector<16x64xf32> to vector<16xf32>
    %153 = vector.shape_cast %152 : vector<16xf32> to vector<16x1xf32>
    %cst_99 = arith.constant 6.400000e+01 : f32
    %154 = vector.broadcast %cst_99 : f32 to vector<16x1xf32>
    %155 = arith.divf %153, %154 : vector<16x1xf32>
    %cst_100 = arith.constant 9.99999974E-6 : f32
    %156 = vector.broadcast %cst_100 : f32 to vector<16x1xf32>
    %157 = arith.addf %155, %156 : vector<16x1xf32>
    %158 = math.rsqrt %157 : vector<16x1xf32>
    %159 = vector.broadcast %158 : vector<16x1xf32> to vector<16x64xf32>
    %160 = arith.mulf %150, %159 : vector<16x64xf32>
    %161 = vector.broadcast %142 : vector<1x64xf32> to vector<16x64xf32>
    %162 = arith.mulf %160, %161 : vector<16x64xf32>
    %163 = vector.broadcast %144 : vector<1x64xf32> to vector<16x64xf32>
    %164 = arith.addf %162, %163 : vector<16x64xf32>
    %c1 = arith.constant 1 : index
    %c0_101 = arith.constant 0 : index
    %c0_102 = arith.constant 0 : index
    %165 = vector.load %arg10[%c1, %c0_101, %c0_102] : memref<2x64x192xf32, #tpu.memory_space<vmem>>, vector<1x64x192xf32>
    %166 = vector.shape_cast %165 : vector<1x64x192xf32> to vector<64x192xf32>
    %cst_103 = arith.constant dense<0.000000e+00> : vector<16x192xf32>
    %167 = tpu.matmul %164, %166, %cst_103 {dimension_numbers = #tpu.dot_dimension_numbers<[1], [0], [0], [1], [0, 0, 1, 1], [], []>} : vector<16x64xf32>, vector<64x192xf32>, vector<16x192xf32> -> vector<16x192xf32>
    %c1_104 = arith.constant 1 : index
    %c0_105 = arith.constant 0 : index
    %c0_106 = arith.constant 0 : index
    %168 = vector.load %arg11[%c1_104, %c0_105, %c0_106] : memref<2x1x192xf32, #tpu.memory_space<vmem>>, vector<1x1x192xf32>
    %169 = vector.shape_cast %168 : vector<1x1x192xf32> to vector<1x192xf32>
    %170 = vector.broadcast %169 : vector<1x192xf32> to vector<16x192xf32>
    %171 = arith.addf %167, %170 : vector<16x192xf32>
    %172 = vector.extract_strided_slice %171 {offsets = [0, 0], sizes = [16, 16], strides = [1, 1]} : vector<16x192xf32> to vector<16x16xf32>
    %173 = vector.extract_strided_slice %171 {offsets = [0, 64], sizes = [16, 16], strides = [1, 1]} : vector<16x192xf32> to vector<16x16xf32>
    %174 = vector.extract_strided_slice %171 {offsets = [0, 128], sizes = [16, 16], strides = [1, 1]} : vector<16x192xf32> to vector<16x16xf32>
    %cst_107 = arith.constant dense<0.000000e+00> : vector<16x16xf32>
    %175 = tpu.matmul %172, %173, %cst_107 {dimension_numbers = #tpu.dot_dimension_numbers<[1], [1], [0], [0], [0, 0, 1, 0], [], []>} : vector<16x16xf32>, vector<16x16xf32>, vector<16x16xf32> -> vector<16x16xf32>
    %cst_108 = arith.constant dense<0xFF800000> : vector<16xf32>
    %176 = vector.multi_reduction <maximumf>, %175, %cst_108 [1] : vector<16x16xf32> to vector<16xf32>
    %177 = vector.shape_cast %176 : vector<16xf32> to vector<16x1xf32>
    %178 = vector.broadcast %177 : vector<16x1xf32> to vector<16x16xf32>
    %179 = arith.subf %175, %178 : vector<16x16xf32>
    %180 = math.exp %179 : vector<16x16xf32>
    %cst_109 = arith.constant dense<0.000000e+00> : vector<16xf32>
    %181 = vector.multi_reduction <add>, %180, %cst_109 [1] : vector<16x16xf32> to vector<16xf32>
    %182 = vector.shape_cast %181 : vector<16xf32> to vector<16x1xf32>
    %183 = vector.broadcast %182 : vector<16x1xf32> to vector<16x16xf32>
    %184 = arith.divf %180, %183 : vector<16x16xf32>
    %cst_110 = arith.constant dense<0.000000e+00> : vector<16x16xf32>
    %185 = tpu.matmul %184, %174, %cst_110 {dimension_numbers = #tpu.dot_dimension_numbers<[1], [0], [0], [1], [0, 0, 1, 1], [], []>} : vector<16x16xf32>, vector<16x16xf32>, vector<16x16xf32> -> vector<16x16xf32>
    %c0_111 = arith.constant 0 : index
    %c0_112 = arith.constant 0 : index
    %186 = vector.load %arg26[%c0_111, %c0_112] : memref<16x64xf32, #tpu.memory_space<vmem>>, vector<16x16xf32>
    tpu.vector_store %arg26[%c0_111, %c0_112], %185 {strides = array<i32>} : memref<16x64xf32, #tpu.memory_space<vmem>>, vector<16x16xf32>,
    %187 = vector.extract_strided_slice %171 {offsets = [0, 16], sizes = [16, 16], strides = [1, 1]} : vector<16x192xf32> to vector<16x16xf32>
    %188 = vector.extract_strided_slice %171 {offsets = [0, 80], sizes = [16, 16], strides = [1, 1]} : vector<16x192xf32> to vector<16x16xf32>
    %189 = vector.extract_strided_slice %171 {offsets = [0, 144], sizes = [16, 16], strides = [1, 1]} : vector<16x192xf32> to vector<16x16xf32>
    %cst_113 = arith.constant dense<0.000000e+00> : vector<16x16xf32>
    %190 = tpu.matmul %187, %188, %cst_113 {dimension_numbers = #tpu.dot_dimension_numbers<[1], [1], [0], [0], [0, 0, 1, 0], [], []>} : vector<16x16xf32>, vector<16x16xf32>, vector<16x16xf32> -> vector<16x16xf32>
    %cst_114 = arith.constant dense<0xFF800000> : vector<16xf32>
    %191 = vector.multi_reduction <maximumf>, %190, %cst_114 [1] : vector<16x16xf32> to vector<16xf32>
    %192 = vector.shape_cast %191 : vector<16xf32> to vector<16x1xf32>
    %193 = vector.broadcast %192 : vector<16x1xf32> to vector<16x16xf32>
    %194 = arith.subf %190, %193 : vector<16x16xf32>
    %195 = math.exp %194 : vector<16x16xf32>
    %cst_115 = arith.constant dense<0.000000e+00> : vector<16xf32>
    %196 = vector.multi_reduction <add>, %195, %cst_115 [1] : vector<16x16xf32> to vector<16xf32>
    %197 = vector.shape_cast %196 : vector<16xf32> to vector<16x1xf32>
    %198 = vector.broadcast %197 : vector<16x1xf32> to vector<16x16xf32>
    %199 = arith.divf %195, %198 : vector<16x16xf32>
    %cst_116 = arith.constant dense<0.000000e+00> : vector<16x16xf32>
    %200 = tpu.matmul %199, %189, %cst_116 {dimension_numbers = #tpu.dot_dimension_numbers<[1], [0], [0], [1], [0, 0, 1, 1], [], []>} : vector<16x16xf32>, vector<16x16xf32>, vector<16x16xf32> -> vector<16x16xf32>
    %c0_117 = arith.constant 0 : index
    %c16_118 = arith.constant 16 : index
    %201 = vector.load %arg26[%c0_117, %c16_118] : memref<16x64xf32, #tpu.memory_space<vmem>>, vector<16x16xf32>
    tpu.vector_store %arg26[%c0_117, %c16_118], %200 {strides = array<i32>} : memref<16x64xf32, #tpu.memory_space<vmem>>, vector<16x16xf32>,
    %202 = vector.extract_strided_slice %171 {offsets = [0, 32], sizes = [16, 16], strides = [1, 1]} : vector<16x192xf32> to vector<16x16xf32>
    %203 = vector.extract_strided_slice %171 {offsets = [0, 96], sizes = [16, 16], strides = [1, 1]} : vector<16x192xf32> to vector<16x16xf32>
    %204 = vector.extract_strided_slice %171 {offsets = [0, 160], sizes = [16, 16], strides = [1, 1]} : vector<16x192xf32> to vector<16x16xf32>
    %cst_119 = arith.constant dense<0.000000e+00> : vector<16x16xf32>
    %205 = tpu.matmul %202, %203, %cst_119 {dimension_numbers = #tpu.dot_dimension_numbers<[1], [1], [0], [0], [0, 0, 1, 0], [], []>} : vector<16x16xf32>, vector<16x16xf32>, vector<16x16xf32> -> vector<16x16xf32>
    %cst_120 = arith.constant dense<0xFF800000> : vector<16xf32>
    %206 = vector.multi_reduction <maximumf>, %205, %cst_120 [1] : vector<16x16xf32> to vector<16xf32>
    %207 = vector.shape_cast %206 : vector<16xf32> to vector<16x1xf32>
    %208 = vector.broadcast %207 : vector<16x1xf32> to vector<16x16xf32>
    %209 = arith.subf %205, %208 : vector<16x16xf32>
    %210 = math.exp %209 : vector<16x16xf32>
    %cst_121 = arith.constant dense<0.000000e+00> : vector<16xf32>
    %211 = vector.multi_reduction <add>, %210, %cst_121 [1] : vector<16x16xf32> to vector<16xf32>
    %212 = vector.shape_cast %211 : vector<16xf32> to vector<16x1xf32>
    %213 = vector.broadcast %212 : vector<16x1xf32> to vector<16x16xf32>
    %214 = arith.divf %210, %213 : vector<16x16xf32>
    %cst_122 = arith.constant dense<0.000000e+00> : vector<16x16xf32>
    %215 = tpu.matmul %214, %204, %cst_122 {dimension_numbers = #tpu.dot_dimension_numbers<[1], [0], [0], [1], [0, 0, 1, 1], [], []>} : vector<16x16xf32>, vector<16x16xf32>, vector<16x16xf32> -> vector<16x16xf32>
    %c0_123 = arith.constant 0 : index
    %c32_124 = arith.constant 32 : index
    %216 = vector.load %arg26[%c0_123, %c32_124] : memref<16x64xf32, #tpu.memory_space<vmem>>, vector<16x16xf32>
    tpu.vector_store %arg26[%c0_123, %c32_124], %215 {strides = array<i32>} : memref<16x64xf32, #tpu.memory_space<vmem>>, vector<16x16xf32>,
    %217 = vector.extract_strided_slice %171 {offsets = [0, 48], sizes = [16, 16], strides = [1, 1]} : vector<16x192xf32> to vector<16x16xf32>
    %218 = vector.extract_strided_slice %171 {offsets = [0, 112], sizes = [16, 16], strides = [1, 1]} : vector<16x192xf32> to vector<16x16xf32>
    %219 = vector.extract_strided_slice %171 {offsets = [0, 176], sizes = [16, 16], strides = [1, 1]} : vector<16x192xf32> to vector<16x16xf32>
    %cst_125 = arith.constant dense<0.000000e+00> : vector<16x16xf32>
    %220 = tpu.matmul %217, %218, %cst_125 {dimension_numbers = #tpu.dot_dimension_numbers<[1], [1], [0], [0], [0, 0, 1, 0], [], []>} : vector<16x16xf32>, vector<16x16xf32>, vector<16x16xf32> -> vector<16x16xf32>
    %cst_126 = arith.constant dense<0xFF800000> : vector<16xf32>
    %221 = vector.multi_reduction <maximumf>, %220, %cst_126 [1] : vector<16x16xf32> to vector<16xf32>
    %222 = vector.shape_cast %221 : vector<16xf32> to vector<16x1xf32>
    %223 = vector.broadcast %222 : vector<16x1xf32> to vector<16x16xf32>
    %224 = arith.subf %220, %223 : vector<16x16xf32>
    %225 = math.exp %224 : vector<16x16xf32>
    %cst_127 = arith.constant dense<0.000000e+00> : vector<16xf32>
    %226 = vector.multi_reduction <add>, %225, %cst_127 [1] : vector<16x16xf32> to vector<16xf32>
    %227 = vector.shape_cast %226 : vector<16xf32> to vector<16x1xf32>
    %228 = vector.broadcast %227 : vector<16x1xf32> to vector<16x16xf32>
    %229 = arith.divf %225, %228 : vector<16x16xf32>
    %cst_128 = arith.constant dense<0.000000e+00> : vector<16x16xf32>
    %230 = tpu.matmul %229, %219, %cst_128 {dimension_numbers = #tpu.dot_dimension_numbers<[1], [0], [0], [1], [0, 0, 1, 1], [], []>} : vector<16x16xf32>, vector<16x16xf32>, vector<16x16xf32> -> vector<16x16xf32>
    %c0_129 = arith.constant 0 : index
    %c48_130 = arith.constant 48 : index
    %231 = vector.load %arg26[%c0_129, %c48_130] : memref<16x64xf32, #tpu.memory_space<vmem>>, vector<16x16xf32>
    tpu.vector_store %arg26[%c0_129, %c48_130], %230 {strides = array<i32>} : memref<16x64xf32, #tpu.memory_space<vmem>>, vector<16x16xf32>,
    %c0_131 = arith.constant 0 : index
    %c0_132 = arith.constant 0 : index
    %232 = vector.load %arg26[%c0_131, %c0_132] : memref<16x64xf32, #tpu.memory_space<vmem>>, vector<16x64xf32>
    %c1_133 = arith.constant 1 : index
    %c0_134 = arith.constant 0 : index
    %c0_135 = arith.constant 0 : index
    %233 = vector.load %arg12[%c1_133, %c0_134, %c0_135] : memref<2x64x64xf32, #tpu.memory_space<vmem>>, vector<1x64x64xf32>
    %234 = vector.shape_cast %233 : vector<1x64x64xf32> to vector<64x64xf32>
    %cst_136 = arith.constant dense<0.000000e+00> : vector<16x64xf32>
    %235 = tpu.matmul %232, %234, %cst_136 {dimension_numbers = #tpu.dot_dimension_numbers<[1], [0], [0], [1], [0, 0, 1, 1], [], []>} : vector<16x64xf32>, vector<64x64xf32>, vector<16x64xf32> -> vector<16x64xf32>
    %c1_137 = arith.constant 1 : index
    %c0_138 = arith.constant 0 : index
    %c0_139 = arith.constant 0 : index
    %236 = vector.load %arg13[%c1_137, %c0_138, %c0_139] : memref<2x1x64xf32, #tpu.memory_space<vmem>>, vector<1x1x64xf32>
    %237 = vector.shape_cast %236 : vector<1x1x64xf32> to vector<1x64xf32>
    %238 = vector.broadcast %237 : vector<1x64xf32> to vector<16x64xf32>
    %239 = arith.addf %235, %238 : vector<16x64xf32>
    %240 = arith.addf %164, %239 : vector<16x64xf32>
    %c1_140 = arith.constant 1 : index
    %c0_141 = arith.constant 0 : index
    %c0_142 = arith.constant 0 : index
    %241 = vector.load %arg14[%c1_140, %c0_141, %c0_142] : memref<2x1x64xf32, #tpu.memory_space<vmem>>, vector<1x1x64xf32>
    %242 = vector.shape_cast %241 : vector<1x1x64xf32> to vector<1x64xf32>
    %c1_143 = arith.constant 1 : index
    %c0_144 = arith.constant 0 : index
    %c0_145 = arith.constant 0 : index
    %243 = vector.load %arg15[%c1_143, %c0_144, %c0_145] : memref<2x1x64xf32, #tpu.memory_space<vmem>>, vector<1x1x64xf32>
    %244 = vector.shape_cast %243 : vector<1x1x64xf32> to vector<1x64xf32>
    %cst_146 = arith.constant dense<0.000000e+00> : vector<16xf32>
    %245 = vector.multi_reduction <add>, %240, %cst_146 [1] : vector<16x64xf32> to vector<16xf32>
    %246 = vector.shape_cast %245 : vector<16xf32> to vector<16x1xf32>
    %cst_147 = arith.constant 6.400000e+01 : f32
    %247 = vector.broadcast %cst_147 : f32 to vector<16x1xf32>
    %248 = arith.divf %246, %247 : vector<16x1xf32>
    %249 = vector.broadcast %248 : vector<16x1xf32> to vector<16x64xf32>
    %250 = arith.subf %240, %249 : vector<16x64xf32>
    %251 = arith.mulf %250, %250 : vector<16x64xf32>
    %cst_148 = arith.constant dense<0.000000e+00> : vector<16xf32>
    %252 = vector.multi_reduction <add>, %251, %cst_148 [1] : vector<16x64xf32> to vector<16xf32>
    %253 = vector.shape_cast %252 : vector<16xf32> to vector<16x1xf32>
    %cst_149 = arith.constant 6.400000e+01 : f32
    %254 = vector.broadcast %cst_149 : f32 to vector<16x1xf32>
    %255 = arith.divf %253, %254 : vector<16x1xf32>
    %cst_150 = arith.constant 9.99999974E-6 : f32
    %256 = vector.broadcast %cst_150 : f32 to vector<16x1xf32>
    %257 = arith.addf %255, %256 : vector<16x1xf32>
    %258 = math.rsqrt %257 : vector<16x1xf32>
    %259 = vector.broadcast %258 : vector<16x1xf32> to vector<16x64xf32>
    %260 = arith.mulf %250, %259 : vector<16x64xf32>
    %261 = vector.broadcast %242 : vector<1x64xf32> to vector<16x64xf32>
    %262 = arith.mulf %260, %261 : vector<16x64xf32>
    %263 = vector.broadcast %244 : vector<1x64xf32> to vector<16x64xf32>
    %264 = arith.addf %262, %263 : vector<16x64xf32>
    %c1_151 = arith.constant 1 : index
    %c0_152 = arith.constant 0 : index
    %c0_153 = arith.constant 0 : index
    %265 = vector.load %arg16[%c1_151, %c0_152, %c0_153] : memref<2x64x128xf32, #tpu.memory_space<vmem>>, vector<1x64x128xf32>
    %266 = vector.shape_cast %265 : vector<1x64x128xf32> to vector<64x128xf32>
    %cst_154 = arith.constant dense<0.000000e+00> : vector<16x128xf32>
    %267 = tpu.matmul %264, %266, %cst_154 {dimension_numbers = #tpu.dot_dimension_numbers<[1], [0], [0], [1], [0, 0, 1, 1], [], []>} : vector<16x64xf32>, vector<64x128xf32>, vector<16x128xf32> -> vector<16x128xf32>
    %c1_155 = arith.constant 1 : index
    %c0_156 = arith.constant 0 : index
    %c0_157 = arith.constant 0 : index
    %268 = vector.load %arg17[%c1_155, %c0_156, %c0_157] : memref<2x1x128xf32, #tpu.memory_space<vmem>>, vector<1x1x128xf32>
    %269 = vector.shape_cast %268 : vector<1x1x128xf32> to vector<1x128xf32>
    %270 = vector.broadcast %269 : vector<1x128xf32> to vector<16x128xf32>
    %271 = arith.addf %267, %270 : vector<16x128xf32>
    %cst_158 = arith.constant 0.000000e+00 : f32
    %272 = vector.broadcast %cst_158 : f32 to vector<16x128xf32>
    %273 = arith.maximumf %271, %272 : vector<16x128xf32>
    %c1_159 = arith.constant 1 : index
    %c0_160 = arith.constant 0 : index
    %c0_161 = arith.constant 0 : index
    %274 = vector.load %arg18[%c1_159, %c0_160, %c0_161] : memref<2x128x64xf32, #tpu.memory_space<vmem>>, vector<1x128x64xf32>
    %275 = vector.shape_cast %274 : vector<1x128x64xf32> to vector<128x64xf32>
    %cst_162 = arith.constant dense<0.000000e+00> : vector<16x64xf32>
    %276 = tpu.matmul %273, %275, %cst_162 {dimension_numbers = #tpu.dot_dimension_numbers<[1], [0], [0], [1], [0, 0, 1, 1], [], []>} : vector<16x128xf32>, vector<128x64xf32>, vector<16x64xf32> -> vector<16x64xf32>
    %c1_163 = arith.constant 1 : index
    %c0_164 = arith.constant 0 : index
    %c0_165 = arith.constant 0 : index
    %277 = vector.load %arg19[%c1_163, %c0_164, %c0_165] : memref<2x1x64xf32, #tpu.memory_space<vmem>>, vector<1x1x64xf32>
    %278 = vector.shape_cast %277 : vector<1x1x64xf32> to vector<1x64xf32>
    %279 = vector.broadcast %278 : vector<1x64xf32> to vector<16x64xf32>
    %280 = arith.addf %276, %279 : vector<16x64xf32>
    %281 = arith.addf %264, %280 : vector<16x64xf32>
    %c1_166 = arith.constant 1 : index
    %c0_167 = arith.constant 0 : index
    %c0_168 = arith.constant 0 : index
    %282 = vector.load %arg20[%c1_166, %c0_167, %c0_168] : memref<2x1x64xf32, #tpu.memory_space<vmem>>, vector<1x1x64xf32>
    %283 = vector.shape_cast %282 : vector<1x1x64xf32> to vector<1x64xf32>
    %c1_169 = arith.constant 1 : index
    %c0_170 = arith.constant 0 : index
    %c0_171 = arith.constant 0 : index
    %284 = vector.load %arg21[%c1_169, %c0_170, %c0_171] : memref<2x1x64xf32, #tpu.memory_space<vmem>>, vector<1x1x64xf32>
    %285 = vector.shape_cast %284 : vector<1x1x64xf32> to vector<1x64xf32>
    %cst_172 = arith.constant dense<0.000000e+00> : vector<16xf32>
    %286 = vector.multi_reduction <add>, %281, %cst_172 [1] : vector<16x64xf32> to vector<16xf32>
    %287 = vector.shape_cast %286 : vector<16xf32> to vector<16x1xf32>
    %cst_173 = arith.constant 6.400000e+01 : f32
    %288 = vector.broadcast %cst_173 : f32 to vector<16x1xf32>
    %289 = arith.divf %287, %288 : vector<16x1xf32>
    %290 = vector.broadcast %289 : vector<16x1xf32> to vector<16x64xf32>
    %291 = arith.subf %281, %290 : vector<16x64xf32>
    %292 = arith.mulf %291, %291 : vector<16x64xf32>
    %cst_174 = arith.constant dense<0.000000e+00> : vector<16xf32>
    %293 = vector.multi_reduction <add>, %292, %cst_174 [1] : vector<16x64xf32> to vector<16xf32>
    %294 = vector.shape_cast %293 : vector<16xf32> to vector<16x1xf32>
    %cst_175 = arith.constant 6.400000e+01 : f32
    %295 = vector.broadcast %cst_175 : f32 to vector<16x1xf32>
    %296 = arith.divf %294, %295 : vector<16x1xf32>
    %cst_176 = arith.constant 9.99999974E-6 : f32
    %297 = vector.broadcast %cst_176 : f32 to vector<16x1xf32>
    %298 = arith.addf %296, %297 : vector<16x1xf32>
    %299 = math.rsqrt %298 : vector<16x1xf32>
    %300 = vector.broadcast %299 : vector<16x1xf32> to vector<16x64xf32>
    %301 = arith.mulf %291, %300 : vector<16x64xf32>
    %302 = vector.broadcast %283 : vector<1x64xf32> to vector<16x64xf32>
    %303 = arith.mulf %301, %302 : vector<16x64xf32>
    %304 = vector.broadcast %285 : vector<1x64xf32> to vector<16x64xf32>
    %305 = arith.addf %303, %304 : vector<16x64xf32>
    %c0_177 = arith.constant 0 : index
    %c0_178 = arith.constant 0 : index
    %306 = vector.load %arg22[%c0_177, %c0_178] : memref<64x1xf32, #tpu.memory_space<vmem>>, vector<64x1xf32>
    %cst_179 = arith.constant dense<0.000000e+00> : vector<16x1xf32>
    %307 = tpu.matmul %305, %306, %cst_179 {dimension_numbers = #tpu.dot_dimension_numbers<[1], [0], [0], [1], [0, 0, 1, 1], [], []>} : vector<16x64xf32>, vector<64x1xf32>, vector<16x1xf32> -> vector<16x1xf32>
    %c0_180 = arith.constant 0 : index
    %c0_181 = arith.constant 0 : index
    %308 = vector.load %arg23[%c0_180, %c0_181] : memref<1x1xf32, #tpu.memory_space<vmem>>, vector<1x1xf32>
    %309 = vector.broadcast %308 : vector<1x1xf32> to vector<16x1xf32>
    %310 = arith.addf %307, %309 : vector<16x1xf32>
    %c0_182 = arith.constant 0 : index
    %c0_183 = arith.constant 0 : index
    %311 = vector.load %arg24[%c0_182, %c0_183] : memref<16x1xf32, #tpu.memory_space<vmem>>, vector<16x1xf32>
    tpu.vector_store %arg24[%c0_182, %c0_183], %310 {strides = array<i32>} : memref<16x1xf32, #tpu.memory_space<vmem>>, vector<16x1xf32>,
    return
  }
}

</mosaic_0001>

<llo_original>
// kernel: scheduling_transformer_forward.1
$region0: #{scheduling_transformer_forward.1}
  #allocation0 [shape = 'u32[]', space=smem, size = 0x4, offset = 0x4, fixed_abs, tag = 'smem constant byte address 0x4 - core index']
  #allocation1 [shape = 'u32[72,128]{1,0:T(1,128)}', space=vmem, size = 0x9000, scoped, tag = 'internal scratch']
  #allocation2 [shape = 'f32[16,64]{1,0:T(8,128)}', space=vmem, size = 0x2000, scoped, tag = 'scratch operand']
  #allocation3 [shape = 'f32[16,64]{1,0:T(8,128)}', space=vmem, size = 0x2000, scoped, tag = 'scratch operand']
  #allocation4 [shape = 'f32[1,1]{1,0:T(1,128)S(1)}', space=vmem, size = 0x200, scoped, tag = 'scoped memory for scheduling_transformer_forward.1']
  %s0 = inlined_call_operand.vmem [shape: f32[4,5], index: 0, kind: input, shape index: {}]
  %s1 = inlined_call_operand.vmem [shape: f32[4,5], index: 1, kind: input, shape index: {}]
  %s2 = inlined_call_operand.vmem [shape: f32[8,9], index: 2, kind: input, shape index: {}]
  %s3 = inlined_call_operand.vmem [shape: f32[16,64], index: 3, kind: input, shape index: {}]
  %s4 = inlined_call_operand.vmem [shape: f32[5,64], index: 4, kind: input, shape index: {}]
  %s5 = inlined_call_operand.hbm [shape: f32[1,64], index: 5, kind: input, shape index: {}]
  %s6 = inlined_call_operand.vmem [shape: f32[5,64], index: 6, kind: input, shape index: {}]
  %s7 = inlined_call_operand.vmem [shape: f32[1,64], index: 7, kind: input, shape index: {}]
  %s8 = inlined_call_operand.vmem [shape: f32[9,64], index: 8, kind: input, shape index: {}]
  %s9 = inlined_call_operand.hbm [shape: f32[1,64], index: 9, kind: input, shape index: {}]
  %s10 = inlined_call_operand.vmem [shape: f32[2,64,192], index: 10, kind: input, shape index: {}]
  %s11 = inlined_call_operand.hbm [shape: f32[2,1,192], index: 11, kind: input, shape index: {}]
  %s12 = inlined_call_operand.vmem [shape: f32[2,64,64], index: 12, kind: input, shape index: {}]
  %s13 = inlined_call_operand.vmem [shape: f32[2,1,64], index: 13, kind: input, shape index: {}]
  %s14 = inlined_call_operand.vmem [shape: f32[2,1,64], index: 14, kind: input, shape index: {}]
  %s15 = inlined_call_operand.hbm [shape: f32[2,1,64], index: 15, kind: input, shape index: {}]
  %s16 = inlined_call_operand.hbm [shape: f32[2,64,128], index: 16, kind: input, shape index: {}]
  %s17 = inlined_call_operand.hbm [shape: f32[2,1,128], index: 17, kind: input, shape index: {}]
  %s18 = inlined_call_operand.vmem [shape: f32[2,128,64], index: 18, kind: input, shape index: {}]
  %s19 = inlined_call_operand.hbm [shape: f32[2,1,64], index: 19, kind: input, shape index: {}]
  %s20 = inlined_call_operand.vmem [shape: f32[2,1,64], index: 20, kind: input, shape index: {}]
  %s21 = inlined_call_operand.vmem [shape: f32[2,1,64], index: 21, kind: input, shape index: {}]
  %s22 = inlined_call_operand.vmem [shape: f32[64,1], index: 22, kind: input, shape index: {}]
  %s23 = inlined_call_operand.<no memory space> [shape: f32[1,1], index: 23, kind: input, shape index: {}]
  %s24 = inlined_call_operand.vmem [shape: f32[16,1], index: 24, kind: output, shape index: {}]
  %s25 = sld [smem:[#allocation0]]
  $region134: #{scheduling_transformer_forward.1} parent=0
    _
  %s27 = ssub.s32 1, %s25
  %s28 = scalar_select 0, %s27, %s25
  %v29 = vstv %s23
  %30 = vst [vmem:[#allocation4] sm:$0x1] %v29
  $region1: #{scheduling_transformer_forward.1} parent=0
    #allocation5 [shape = 'u8[512]{0}', space=vmem, size = 0x400, scoped, tag = 'input window, operand 5, single buffered']
    #allocation6 [shape = 's32[1]{0}', space=sflag, size = 0x4, scoped, tag = 'scoped memory for scheduling_transformer_forward.1']
    #allocation7 [shape = 'u8[512]{0}', space=vmem, size = 0x400, scoped, tag = 'input window, operand 9, single buffered']
    #allocation8 [shape = 's32[1]{0}', space=sflag, size = 0x4, scoped, tag = 'scoped memory for scheduling_transformer_forward.1']
    #allocation9 [shape = 'u8[2048]{0}', space=vmem, size = 0x800, scoped, tag = 'input window, operand 11, single buffered']
    #allocation10 [shape = 'u8[1024]{0}', space=vmem, size = 0x400, scoped, tag = 'input window, operand 15, single buffered']
    #allocation11 [shape = 's32[1]{0}', space=sflag, size = 0x4, scoped, tag = 'scoped memory for scheduling_transformer_forward.1']
    #allocation12 [shape = 'u8[65536]{0}', space=vmem, size = 0x10000, scoped, tag = 'input window, operand 16, single buffered']
    #allocation13 [shape = 'u8[1024]{0}', space=vmem, size = 0x400, scoped, tag = 'input window, operand 17, single buffered']
    #allocation14 [shape = 's32[1]{0}', space=sflag, size = 0x4, scoped, tag = 'scoped memory for scheduling_transformer_forward.1']
    #allocation15 [shape = 'u8[1024]{0}', space=vmem, size = 0x400, scoped, tag = 'input window, operand 19, single buffered']
    %31 = vsyncpa [#allocation6], 0
    %32 = vsyncpa [#allocation8], 0
    %33 = vsyncpa [#allocation11], 0
    %34 = vsyncpa [#allocation14], 0
    // Predicated region
    $region2: #{scheduling_transformer_forward.1} parent=1 // pred_check
      _
    $region3: #{scheduling_transformer_forward.1} parent=1 // pred_check_branch
      %36 = sbr.rel (0) target = $region5
    $region4: #{scheduling_transformer_forward.1} parent=1 // pred_region
      _
    $region5: #{scheduling_transformer_forward.1} parent=1 // pred_fallthru
      _
    // Predicated region
    $region6: #{scheduling_transformer_forward.1} parent=1 // pred_check
      _
    $region7: #{scheduling_transformer_forward.1} parent=1 // pred_check_branch
      %38 = sbr.rel (0) target = $region9
    $region8: #{scheduling_transformer_forward.1} parent=1 // pred_region
      _
    $region9: #{scheduling_transformer_forward.1} parent=1 // pred_fallthru
      _
    // Predicated region
    $region10: #{scheduling_transformer_forward.1} parent=1 // pred_check
      _
    $region11: #{scheduling_transformer_forward.1} parent=1 // pred_check_branch
      %40 = sbr.rel (0) target = $region13
    $region12: #{scheduling_transformer_forward.1} parent=1 // pred_region
      _
    $region13: #{scheduling_transformer_forward.1} parent=1 // pred_fallthru
      _
    // Predicated region
    $region14: #{scheduling_transformer_forward.1} parent=1 // pred_check
      _
    $region15: #{scheduling_transformer_forward.1} parent=1 // pred_check_branch
      %42 = sbr.rel (0) target = $region17
    $region16: #{scheduling_transformer_forward.1} parent=1 // pred_region
      _
    $region17: #{scheduling_transformer_forward.1} parent=1 // pred_fallthru
      _
    // Predicated region
    $region18: #{scheduling_transformer_forward.1} parent=1 // pred_check
      _
    $region19: #{scheduling_transformer_forward.1} parent=1 // pred_check_branch
      %44 = sbr.rel (0) target = $region21
    $region20: #{scheduling_transformer_forward.1} parent=1 // pred_region
      _
    $region21: #{scheduling_transformer_forward.1} parent=1 // pred_fallthru
      _
    // Predicated region
    $region22: #{scheduling_transformer_forward.1} parent=1 // pred_check
      _
    $region23: #{scheduling_transformer_forward.1} parent=1 // pred_check_branch
      %46 = sbr.rel (0) target = $region25
    $region24: #{scheduling_transformer_forward.1} parent=1 // pred_region
      %48 = vsyncadd [#allocation6], 0
      %s50 = sshll.u32 %s5, 4
      %s51 = int_to_ptr.hbm [resolvable:$true] %s50
      %s52 = sshll.u32 [#allocation5], 4
      %s53 = int_to_ptr.vmem [resolvable:$true] %s52
      %55 = dma.hbm_to_vmem [thread:$0]  %s51, 16, %s53, [#allocation6]
    $region25: #{scheduling_transformer_forward.1} parent=1 // pred_fallthru
      _
    // Predicated region
    $region26: #{scheduling_transformer_forward.1} parent=1 // pred_check
      _
    $region27: #{scheduling_transformer_forward.1} parent=1 // pred_check_branch
      %57 = sbr.rel (0) target = $region29
    $region28: #{scheduling_transformer_forward.1} parent=1 // pred_region
      _
    $region29: #{scheduling_transformer_forward.1} parent=1 // pred_fallthru
      _
    // Predicated region
    $region30: #{scheduling_transformer_forward.1} parent=1 // pred_check
      _
    $region31: #{scheduling_transformer_forward.1} parent=1 // pred_check_branch
      %59 = sbr.rel (0) target = $region33
    $region32: #{scheduling_transformer_forward.1} parent=1 // pred_region
      _
    $region33: #{scheduling_transformer_forward.1} parent=1 // pred_fallthru
      _
    // Predicated region
    $region34: #{scheduling_transformer_forward.1} parent=1 // pred_check
      _
    $region35: #{scheduling_transformer_forward.1} parent=1 // pred_check_branch
      %61 = sbr.rel (0) target = $region37
    $region36: #{scheduling_transformer_forward.1} parent=1 // pred_region
      _
    $region37: #{scheduling_transformer_forward.1} parent=1 // pred_fallthru
      _
    // Predicated region
    $region38: #{scheduling_transformer_forward.1} parent=1 // pred_check
      _
    $region39: #{scheduling_transformer_forward.1} parent=1 // pred_check_branch
      %63 = sbr.rel (0) target = $region41
    $region40: #{scheduling_transformer_forward.1} parent=1 // pred_region
      %65 = vsyncadd [#allocation8], 0
      %s67 = sshll.u32 %s9, 4
      %s68 = int_to_ptr.hbm [resolvable:$true] %s67
      %s69 = sshll.u32 [#allocation7], 4
      %s70 = int_to_ptr.vmem [resolvable:$true] %s69
      %72 = dma.hbm_to_vmem [thread:$0]  %s68, 16, %s70, [#allocation8]
    $region41: #{scheduling_transformer_forward.1} parent=1 // pred_fallthru
      _
    // Predicated region
    $region42: #{scheduling_transformer_forward.1} parent=1 // pred_check
      _
    $region43: #{scheduling_transformer_forward.1} parent=1 // pred_check_branch
      %74 = sbr.rel (0) target = $region45
    $region44: #{scheduling_transformer_forward.1} parent=1 // pred_region
      _
    $region45: #{scheduling_transformer_forward.1} parent=1 // pred_fallthru
      _
    // Predicated region
    $region46: #{scheduling_transformer_forward.1} parent=1 // pred_check
      _
    $region47: #{scheduling_transformer_forward.1} parent=1 // pred_check_branch
      %76 = sbr.rel (0) target = $region49
    $region48: #{scheduling_transformer_forward.1} parent=1 // pred_region
      %78 = vsyncadd [#allocation8], 0
      %s79 = sshll.u32 %s11, 4
      %s80 = int_to_ptr.hbm [resolvable:$true] %s79
      %s81 = sshll.u32 [#allocation9], 4
      %s82 = int_to_ptr.vmem [resolvable:$true] %s81
      %87 = dma.hbm_to_vmem [thread:$0]  %s80, 64, %s82, [#allocation8], 32, 32, 2
    $region49: #{scheduling_transformer_forward.1} parent=1 // pred_fallthru
      _
    // Predicated region
    $region50: #{scheduling_transformer_forward.1} parent=1 // pred_check
      _
    $region51: #{scheduling_transformer_forward.1} parent=1 // pred_check_branch
      %89 = sbr.rel (0) target = $region53
    $region52: #{scheduling_transformer_forward.1} parent=1 // pred_region
      _
    $region53: #{scheduling_transformer_forward.1} parent=1 // pred_fallthru
      _
    // Predicated region
    $region54: #{scheduling_transformer_forward.1} parent=1 // pred_check
      _
    $region55: #{scheduling_transformer_forward.1} parent=1 // pred_check_branch
      %91 = sbr.rel (0) target = $region57
    $region56: #{scheduling_transformer_forward.1} parent=1 // pred_region
      _
    $region57: #{scheduling_transformer_forward.1} parent=1 // pred_fallthru
      _
    // Predicated region
    $region58: #{scheduling_transformer_forward.1} parent=1 // pred_check
      _
    $region59: #{scheduling_transformer_forward.1} parent=1 // pred_check_branch
      %93 = sbr.rel (0) target = $region61
    $region60: #{scheduling_transformer_forward.1} parent=1 // pred_region
      _
    $region61: #{scheduling_transformer_forward.1} parent=1 // pred_fallthru
      _
    // Predicated region
    $region62: #{scheduling_transformer_forward.1} parent=1 // pred_check
      _
    $region63: #{scheduling_transformer_forward.1} parent=1 // pred_check_branch
      %95 = sbr.rel (0) target = $region65
    $region64: #{scheduling_transformer_forward.1} parent=1 // pred_region
      %97 = vsyncadd [#allocation11], 0
      %s98 = sshll.u32 %s15, 4
      %s99 = int_to_ptr.hbm [resolvable:$true] %s98
      %s100 = sshll.u32 [#allocation10], 4
      %s101 = int_to_ptr.vmem [resolvable:$true] %s100
      %106 = dma.hbm_to_vmem [thread:$0]  %s99, 32, %s101, [#allocation11], 16, 16, 1
    $region65: #{scheduling_transformer_forward.1} parent=1 // pred_fallthru
      _
    // Predicated region
    $region66: #{scheduling_transformer_forward.1} parent=1 // pred_check
      _
    $region67: #{scheduling_transformer_forward.1} parent=1 // pred_check_branch
      %108 = sbr.rel (0) target = $region69
    $region68: #{scheduling_transformer_forward.1} parent=1 // pred_region
      %110 = vsyncadd [#allocation11], 0
      %s111 = sshll.u32 %s16, 4
      %s112 = int_to_ptr.hbm [resolvable:$true] %s111
      %s113 = sshll.u32 [#allocation12], 4
      %s114 = int_to_ptr.vmem [resolvable:$true] %s113
      %119 = dma.hbm_to_vmem [thread:$0]  %s112, 2048, %s114, [#allocation11], 128, 128, 8
    $region69: #{scheduling_transformer_forward.1} parent=1 // pred_fallthru
      _
    // Predicated region
    $region70: #{scheduling_transformer_forward.1} parent=1 // pred_check
      _
    $region71: #{scheduling_transformer_forward.1} parent=1 // pred_check_branch
      %121 = sbr.rel (0) target = $region73
    $region72: #{scheduling_transformer_forward.1} parent=1 // pred_region
      %123 = vsyncadd [#allocation14], 0
      %s124 = sshll.u32 %s17, 4
      %s125 = int_to_ptr.hbm [resolvable:$true] %s124
      %s126 = sshll.u32 [#allocation13], 4
      %s127 = int_to_ptr.vmem [resolvable:$true] %s126
      %132 = dma.hbm_to_vmem [thread:$0]  %s125, 32, %s127, [#allocation14], 16, 16, 1
    $region73: #{scheduling_transformer_forward.1} parent=1 // pred_fallthru
      _
    // Predicated region
    $region74: #{scheduling_transformer_forward.1} parent=1 // pred_check
      _
    $region75: #{scheduling_transformer_forward.1} parent=1 // pred_check_branch
      %134 = sbr.rel (0) target = $region77
    $region76: #{scheduling_transformer_forward.1} parent=1 // pred_region
      _
    $region77: #{scheduling_transformer_forward.1} parent=1 // pred_fallthru
      _
    // Predicated region
    $region78: #{scheduling_transformer_forward.1} parent=1 // pred_check
      _
    $region79: #{scheduling_transformer_forward.1} parent=1 // pred_check_branch
      %136 = sbr.rel (0) target = $region81
    $region80: #{scheduling_transformer_forward.1} parent=1 // pred_region
      %138 = vsyncadd [#allocation14], 0
      %s139 = sshll.u32 %s19, 4
      %s140 = int_to_ptr.hbm [resolvable:$true] %s139
      %s141 = sshll.u32 [#allocation15], 4
      %s142 = int_to_ptr.vmem [resolvable:$true] %s141
      %147 = dma.hbm_to_vmem [thread:$0]  %s140, 32, %s142, [#allocation14], 16, 16, 1
    $region81: #{scheduling_transformer_forward.1} parent=1 // pred_fallthru
      _
    // Predicated region
    $region82: #{scheduling_transformer_forward.1} parent=1 // pred_check
      _
    $region83: #{scheduling_transformer_forward.1} parent=1 // pred_check_branch
      %149 = sbr.rel (0) target = $region85
    $region84: #{scheduling_transformer_forward.1} parent=1 // pred_region
      _
    $region85: #{scheduling_transformer_forward.1} parent=1 // pred_fallthru
      _
    // Predicated region
    $region86: #{scheduling_transformer_forward.1} parent=1 // pred_check
      _
    $region87: #{scheduling_transformer_forward.1} parent=1 // pred_check_branch
      %151 = sbr.rel (0) target = $region89
    $region88: #{scheduling_transformer_forward.1} parent=1 // pred_region
      _
    $region89: #{scheduling_transformer_forward.1} parent=1 // pred_fallthru
      _
    // Predicated region
    $region90: #{scheduling_transformer_forward.1} parent=1 // pred_check
      _
    $region91: #{scheduling_transformer_forward.1} parent=1 // pred_check_branch
      %153 = sbr.rel (0) target = $region93
    $region92: #{scheduling_transformer_forward.1} parent=1 // pred_region
      _
    $region93: #{scheduling_transformer_forward.1} parent=1 // pred_fallthru
      _
    // Predicated region
    $region94: #{scheduling_transformer_forward.1} parent=1 // pred_check
      _
    $region95: #{scheduling_transformer_forward.1} parent=1 // pred_check_branch
      %155 = sbr.rel (0) target = $region97
    $region96: #{scheduling_transformer_forward.1} parent=1 // pred_region
      _
    $region97: #{scheduling_transformer_forward.1} parent=1 // pred_fallthru
      _
    // Predicated region
    $region98: #{scheduling_transformer_forward.1} parent=1 // pred_check
      _
    $region99: #{scheduling_transformer_forward.1} parent=1 // pred_check_branch
      %157 = sbr.rel (0) target = $region101
    $region100: #{scheduling_transformer_forward.1} parent=1 // pred_region
      %159 = dma.done [#allocation6], 16
    $region101: #{scheduling_transformer_forward.1} parent=1 // pred_fallthru
      _
    // Predicated region
    $region102: #{scheduling_transformer_forward.1} parent=1 // pred_check
      _
    $region103: #{scheduling_transformer_forward.1} parent=1 // pred_check_branch
      %161 = sbr.rel (0) target = $region105
    $region104: #{scheduling_transformer_forward.1} parent=1 // pred_region
      %163 = dma.done [#allocation8], 16
    $region105: #{scheduling_transformer_forward.1} parent=1 // pred_fallthru
      _
    // Predicated region
    $region106: #{scheduling_transformer_forward.1} parent=1 // pred_check
      _
    $region107: #{scheduling_transformer_forward.1} parent=1 // pred_check_branch
      %165 = sbr.rel (0) target = $region109
    $region108: #{scheduling_transformer_forward.1} parent=1 // pred_region
      %167 = dma.done [#allocation8], 64
    $region109: #{scheduling_transformer_forward.1} parent=1 // pred_fallthru
      _
    // Predicated region
    $region110: #{scheduling_transformer_forward.1} parent=1 // pred_check
      _
    $region111: #{scheduling_transformer_forward.1} parent=1 // pred_check_branch
      %169 = sbr.rel (0) target = $region113
    $region112: #{scheduling_transformer_forward.1} parent=1 // pred_region
      %171 = dma.done [#allocation11], 32
    $region113: #{scheduling_transformer_forward.1} parent=1 // pred_fallthru
      _
    // Predicated region
    $region114: #{scheduling_transformer_forward.1} parent=1 // pred_check
      _
    $region115: #{scheduling_transformer_forward.1} parent=1 // pred_check_branch
      %173 = sbr.rel (0) target = $region117
    $region116: #{scheduling_transformer_forward.1} parent=1 // pred_region
      %175 = dma.done [#allocation11], 2048
    $region117: #{scheduling_transformer_forward.1} parent=1 // pred_fallthru
      _
    // Predicated region
    $region118: #{scheduling_transformer_forward.1} parent=1 // pred_check
      _
    $region119: #{scheduling_transformer_forward.1} parent=1 // pred_check_branch
      %177 = sbr.rel (0) target = $region121
    $region120: #{scheduling_transformer_forward.1} parent=1 // pred_region
      %179 = dma.done [#allocation14], 32
    $region121: #{scheduling_transformer_forward.1} parent=1 // pred_fallthru
      _
    // Predicated region
    $region122: #{scheduling_transformer_forward.1} parent=1 // pred_check
      _
    $region123: #{scheduling_transformer_forward.1} parent=1 // pred_check_branch
      %181 = sbr.rel (0) target = $region125
    $region124: #{scheduling_transformer_forward.1} parent=1 // pred_region
      %183 = dma.done [#allocation14], 32
    $region125: #{scheduling_transformer_forward.1} parent=1 // pred_fallthru
      _
    %v184 = vld [vmem:[%s0] sm:$0xf]
    %v185 = vld [vmem:[%s4] sm:$0x1f]
    %v186 = vld [vmem:[#allocation5] sm:$0x1]
    %v188 = vperm.slane %v186, 0
    %vm190 = vcmask 39936
    %v192 = vsel %vm190, %v184, 0
    %vm194 = vcmask 1044480
    %v196 = vsel %vm194, %v185, 0
    %198 = vmatpush.msra.mxu0 0.0
    %199 = vmatpush.msra.mxu0 0.0
    %200 = vmatpush.msra.mxu0 0.0
    %201 = vmatpush.msra.mxu0 0.0
    %202 = vmatpush.msra.mxu0 0.0
    %203 = vmatpush.msra.mxu0 0.0
    %204 = vmatpush.msra.mxu0 0.0
    %205 = vmatpush.msra.mxu0 0.0
    %206 = vmatpush.msra.mxu0 0.0
    %207 = vmatpush.msra.mxu0 0.0
    %208 = vmatpush.msra.mxu0 0.0
    %209 = vmatpush.msra.mxu0 0.0
    %210 = vmatpush.msra.mxu0 0.0
    %211 = vmatpush.msra.mxu0 0.0
    %212 = vmatpush.msra.mxu0 0.0
    %213 = vmatpush.msra.mxu0 %v196
    %214 = vmatmul.f32.gmra.mxu0 %v192
    %v215 = vpop.f32.mrf.mxu0
    %v216 = vadd.f32 %v188, %v215
    %217 = vdwg.mxu0
    %vm218 = vcmask 519168
    %219 = vst.msk [vmem:[#allocation2] sm:$0xf] %vm218, %v216
    %v220 = vld [vmem:[%s1] sm:$0xf]
    %v221 = vld [vmem:[%s6] sm:$0x1f]
    %v222 = vld [vmem:[%s7] sm:$0x1]
    %v224 = vperm.slane %v222, 0
    %v227 = vsel %vm190, %v220, 0
    %v230 = vsel %vm194, %v221, 0
    %232 = vmatpush.msra.mxu0 0.0
    %233 = vmatpush.msra.mxu0 0.0
    %234 = vmatpush.msra.mxu0 0.0
    %235 = vmatpush.msra.mxu0 0.0
    %236 = vmatpush.msra.mxu0 0.0
    %237 = vmatpush.msra.mxu0 0.0
    %238 = vmatpush.msra.mxu0 0.0
    %239 = vmatpush.msra.mxu0 0.0
    %240 = vmatpush.msra.mxu0 0.0
    %241 = vmatpush.msra.mxu0 0.0
    %242 = vmatpush.msra.mxu0 0.0
    %243 = vmatpush.msra.mxu0 0.0
    %244 = vmatpush.msra.mxu0 0.0
    %245 = vmatpush.msra.mxu0 0.0
    %246 = vmatpush.msra.mxu0 0.0
    %247 = vmatpush.msra.mxu0 %v230
    %248 = vmatmul.f32.gmra.mxu0 %v227
    %v249 = vpop.f32.mrf.mxu0
    %v250 = vadd.f32 %v224, %v249
    %251 = vdwg.mxu0
    %252 = vst.msk [vmem:[#allocation2 + $0x4] sm:$0xf] %vm218, %v250
    %v253 = vld [vmem:[%s2] sm:$0xff]
    %v254 = vld [vmem:[%s8] sm:$0xff]
    %v255 = vld [vmem:[%s8 + $0x8] sm:$0x1]
    %v256 = vld [vmem:[#allocation7] sm:$0x1]
    %v258 = vperm.slane %v256, 0
    %vm260 = vcmask 72704
    %v262 = vsel %vm260, %v253, 0
    %vm264 = vcmask 1040384
    %v266 = vsel %vm264, %v255, 0
    %268 = vmatpush.msra.mxu0 0.0
    %269 = vmatpush.msra.mxu0 0.0
    %270 = vmatpush.msra.mxu0 0.0
    %271 = vmatpush.msra.mxu0 0.0
    %272 = vmatpush.msra.mxu0 0.0
    %273 = vmatpush.msra.mxu0 0.0
    %274 = vmatpush.msra.mxu0 0.0
    %275 = vmatpush.msra.mxu0 0.0
    %276 = vmatpush.msra.mxu0 0.0
    %277 = vmatpush.msra.mxu0 0.0
    %278 = vmatpush.msra.mxu0 0.0
    %279 = vmatpush.msra.mxu0 0.0
    %280 = vmatpush.msra.mxu0 0.0
    %281 = vmatpush.msra.mxu0 0.0
    %282 = vmatpush.msra.mxu0 %v266
    %283 = vmatpush.msra.mxu0 %v254
    %284 = vmatmul.f32.gmra.mxu0 %v262
    %v285 = vpop.f32.mrf.mxu0
    %v286 = vadd.f32 %v258, %v285
    %287 = vdwg.mxu0
    %vm288 = vcmask 523264
    %289 = vst.msk [vmem:[#allocation2 + $0x8] sm:$0xff] %vm288, %v286
    %v290 = vld [vmem:[#allocation2] sm:$0xff]
    %v291 = vld [vmem:[#allocation2 + $0x8] sm:$0xff]
    %v292 = vld [vmem:[%s3] sm:$0xff]
    %v293 = vld [vmem:[%s3 + $0x8] sm:$0xff]
    %v294 = vadd.f32 %v290, %v292
    %v295 = vadd.f32 %v291, %v293
    %v296 = vld [vmem:[%s10] sm:$0xff]
    %v297 = vld [vmem:[%s10 + $0x8] sm:$0xff]
    %v298 = vld [vmem:[%s10 + $0x10] sm:$0xff]
    %v299 = vld [vmem:[%s10 + $0x18] sm:$0xff]
    %v300 = vld [vmem:[%s10 + $0x20] sm:$0xff]
    %v301 = vld [vmem:[%s10 + $0x28] sm:$0xff]
    %v302 = vld [vmem:[%s10 + $0x30] sm:$0xff]
    %v303 = vld [vmem:[%s10 + $0x38] sm:$0xff]
    %v304 = vld [vmem:[%s10 + $0x40] sm:$0xff]
    %v305 = vld [vmem:[%s10 + $0x48] sm:$0xff]
    %v306 = vld [vmem:[%s10 + $0x50] sm:$0xff]
    %v307 = vld [vmem:[%s10 + $0x58] sm:$0xff]
    %v308 = vld [vmem:[%s10 + $0x60] sm:$0xff]
    %v309 = vld [vmem:[%s10 + $0x68] sm:$0xff]
    %v310 = vld [vmem:[%s10 + $0x70] sm:$0xff]
    %v311 = vld [vmem:[%s10 + $0x78] sm:$0xff]
    %v312 = vld [vmem:[#allocation9] sm:$0x3]
    %v314 = vperm.slane %v312, 0
    %v315 = vperm.slane %v312, 1
    %v319 = vsel %vm288, %v294, 0
    %v322 = vsel %vm288, %v295, 0
    %324 = vmatpush.msra.mxu0 0.0
    %325 = vmatpush.msra.mxu0 0.0
    %326 = vmatpush.msra.mxu0 0.0
    %327 = vmatpush.msra.mxu0 0.0
    %328 = vmatpush.msra.mxu0 0.0
    %329 = vmatpush.msra.mxu0 0.0
    %330 = vmatpush.msra.mxu0 0.0
    %331 = vmatpush.msra.mxu0 0.0
    %332 = vmatpush.msra.mxu0 %v310
    %333 = vmatpush.msra.mxu0 %v308
    %334 = vmatpush.msra.mxu0 %v306
    %335 = vmatpush.msra.mxu0 %v304
    %336 = vmatpush.msra.mxu0 %v302
    %337 = vmatpush.msra.mxu0 %v300
    %338 = vmatpush.msra.mxu0 %v298
    %339 = vmatpush.msra.mxu0 %v296
    %340 = vmatmul.f32.gmra.mxu0 %v319
    %v341 = vpop.f32.mrf.mxu0
    %v342 = vadd.f32 %v314, %v341
    %343 = vmatmul.f32.gmra.mxu0 %v322
    %v344 = vpop.f32.mrf.mxu0
    %v345 = vadd.f32 %v314, %v344
    %346 = vdwg.mxu0
    %347 = vmatpush.msra.mxu0 0.0
    %348 = vmatpush.msra.mxu0 0.0
    %349 = vmatpush.msra.mxu0 0.0
    %350 = vmatpush.msra.mxu0 0.0
    %351 = vmatpush.msra.mxu0 0.0
    %352 = vmatpush.msra.mxu0 0.0
    %353 = vmatpush.msra.mxu0 0.0
    %354 = vmatpush.msra.mxu0 0.0
    %355 = vmatpush.msra.mxu0 %v311
    %356 = vmatpush.msra.mxu0 %v309
    %357 = vmatpush.msra.mxu0 %v307
    %358 = vmatpush.msra.mxu0 %v305
    %359 = vmatpush.msra.mxu0 %v303
    %360 = vmatpush.msra.mxu0 %v301
    %361 = vmatpush.msra.mxu0 %v299
    %362 = vmatpush.msra.mxu0 %v297
    %363 = vmatmul.f32.gmra.mxu0 %v319
    %v364 = vpop.f32.mrf.mxu0
    %v365 = vadd.f32 %v315, %v364
    %366 = vmatmul.f32.gmra.mxu0 %v322
    %v367 = vpop.f32.mrf.mxu0
    %v368 = vadd.f32 %v315, %v367
    %369 = vdwg.mxu0
    %372 = vrot.lane.b32.xlu0 %v342, 64
    %v373 = vpop.permute.xlu0 %372
    %374 = vrot.lane.b32.xlu0 %v345, 64
    %v375 = vpop.permute.xlu0 %374
    %vm376 = vcmask 130048
    %v377 = vsel %vm376, %v342, 0
    %v379 = vsel %vm376, %v345, 0
    %v381 = vsel %vm376, %v373, 0
    %v383 = vsel %vm376, %v375, 0
    %385 = vmatpush.xpose.msra.mxu0 0.0
    %386 = vmatpush.xpose.msra.mxu0 0.0
    %387 = vmatpush.xpose.msra.mxu0 0.0
    %388 = vmatpush.xpose.msra.mxu0 0.0
    %389 = vmatpush.xpose.msra.mxu0 0.0
    %390 = vmatpush.xpose.msra.mxu0 0.0
    %391 = vmatpush.xpose.msra.mxu0 0.0
    %392 = vmatpush.xpose.msra.mxu0 0.0
    %393 = vmatpush.xpose.msra.mxu0 0.0
    %394 = vmatpush.xpose.msra.mxu0 0.0
    %395 = vmatpush.xpose.msra.mxu0 0.0
    %396 = vmatpush.xpose.msra.mxu0 0.0
    %397 = vmatpush.xpose.msra.mxu0 0.0
    %398 = vmatpush.xpose.msra.mxu0 0.0
    %399 = vmatpush.xpose.msra.mxu0 %v383
    %400 = vmatpush.xpose.msra.mxu0 %v381
    %401 = vmatmul.f32.gmra.mxu0 %v377
    %v402 = vpop.f32.mrf.mxu0
    %v403 = vadd.f32 0.0, %v402
    %404 = vmatmul.f32.gmra.mxu0 %v379
    %v405 = vpop.f32.mrf.mxu0
    %v406 = vadd.f32 0.0, %v405
    %407 = vdwg.mxu0
    %v408 = vsel %vm376, %v403, -inf
    %409 = vmax.xlane.f32.xlu0 %v408
    %v410 = vpop.xlane.xlu0 %409
    %v411 = vsel %vm376, %v406, -inf
    %412 = vmax.xlane.f32.xlu0 %v411
    %v413 = vpop.xlane.xlu0 %412
    %v414 = vsub.f32 %v403, %v410
    %v415 = vsub.f32 %v406, %v413
    %v416 = vmul.f32 %v414, 1.442695
    %v417 = vpow.pop %v416
    %v418 = vmul.f32 %v415, 1.442695
    %v419 = vpow.pop %v418
    %v420 = vsel %vm376, %v417, 0.0
    %421 = vadd.xlane.f32.xlu0 %v420
    %v422 = vpop.xlane.xlu0 %421
    %v423 = vsel %vm376, %v419, 0.0
    %424 = vadd.xlane.f32.xlu0 %v423
    %v425 = vpop.xlane.xlu0 %424
    %v426 = vrcp.pop %v422
    %v427 = vmul.f32 %v422, %v426
    %v428 = vsub.f32 1.0, %v427
    %v429 = vmul.f32 %v426, %v428
    %v430 = vadd.f32 %v426, %v429
    %vm431 = vweird.f32 %v422
    %vm432 = vweird.f32 %v426
    %vm433 = vmor %vm431, %vm432
    %v434 = vsel %vm433, %v426, %v430
    %v435 = vand.u32 2147483647, %v422
    %vm436 = vcmp.eq.f32.partialorder %v435, 8.507059e+37
    %v437 = vand.u32 %v422, 2147483648
    %v438 = vor.u32 1.1754944e-38, %v437
    %v439 = vsel %vm436, %v438, %v434
    %v440 = vmul.f32 %v417, %v439
    %v441 = vrcp.pop %v425
    %v442 = vmul.f32 %v425, %v441
    %v443 = vsub.f32 1.0, %v442
    %v444 = vmul.f32 %v441, %v443
    %v445 = vadd.f32 %v441, %v444
    %vm446 = vweird.f32 %v425
    %vm447 = vweird.f32 %v441
    %vm448 = vmor %vm446, %vm447
    %v449 = vsel %vm448, %v441, %v445
    %v450 = vand.u32 2147483647, %v425
    %vm451 = vcmp.eq.f32.partialorder %v450, 8.507059e+37
    %v452 = vand.u32 %v425, 2147483648
    %v453 = vor.u32 1.1754944e-38, %v452
    %v454 = vsel %vm451, %v453, %v449
    %v455 = vmul.f32 %v419, %v454
    %v457 = vsel %vm376, %v440, 0
    %v460 = vsel %vm376, %v455, 0
    %462 = vmatpush.msra.mxu0 0.0
    %463 = vmatpush.msra.mxu0 0.0
    %464 = vmatpush.msra.mxu0 0.0
    %465 = vmatpush.msra.mxu0 0.0
    %466 = vmatpush.msra.mxu0 0.0
    %467 = vmatpush.msra.mxu0 0.0
    %468 = vmatpush.msra.mxu0 0.0
    %469 = vmatpush.msra.mxu0 0.0
    %470 = vmatpush.msra.mxu0 0.0
    %471 = vmatpush.msra.mxu0 0.0
    %472 = vmatpush.msra.mxu0 0.0
    %473 = vmatpush.msra.mxu0 0.0
    %474 = vmatpush.msra.mxu0 0.0
    %475 = vmatpush.msra.mxu0 0.0
    %476 = vmatpush.msra.mxu0 %v368
    %477 = vmatpush.msra.mxu0 %v365
    %478 = vmatmul.f32.gmra.mxu0 %v457
    %v479 = vpop.f32.mrf.mxu0
    %v480 = vadd.f32 0.0, %v479
    %481 = vmatmul.f32.gmra.mxu0 %v460
    %v482 = vpop.f32.mrf.mxu0
    %v483 = vadd.f32 0.0, %v482
    %484 = vdwg.mxu0
    %485 = vst.msk [vmem:[#allocation3] sm:$0xff] %vm376, %v480
    %486 = vst.msk [vmem:[#allocation3 + $0x8] sm:$0xff] %vm376, %v483
    %487 = vrot.lane.b32.xlu0 %v342, 112
    %v488 = vpop.permute.xlu0 %487
    %489 = vrot.lane.b32.xlu0 %v345, 112
    %v490 = vpop.permute.xlu0 %489
    %491 = vrot.lane.b32.xlu0 %v342, 48
    %v492 = vpop.permute.xlu0 %491
    %493 = vrot.lane.b32.xlu0 %v345, 48
    %v494 = vpop.permute.xlu0 %493
    %v495 = vsel %vm376, %v488, 0
    %v497 = vsel %vm376, %v490, 0
    %v499 = vsel %vm376, %v492, 0
    %v501 = vsel %vm376, %v494, 0
    %503 = vmatpush.xpose.msra.mxu0 0.0
    %504 = vmatpush.xpose.msra.mxu0 0.0
    %505 = vmatpush.xpose.msra.mxu0 0.0
    %506 = vmatpush.xpose.msra.mxu0 0.0
    %507 = vmatpush.xpose.msra.mxu0 0.0
    %508 = vmatpush.xpose.msra.mxu0 0.0
    %509 = vmatpush.xpose.msra.mxu0 0.0
    %510 = vmatpush.xpose.msra.mxu0 0.0
    %511 = vmatpush.xpose.msra.mxu0 0.0
    %512 = vmatpush.xpose.msra.mxu0 0.0
    %513 = vmatpush.xpose.msra.mxu0 0.0
    %514 = vmatpush.xpose.msra.mxu0 0.0
    %515 = vmatpush.xpose.msra.mxu0 0.0
    %516 = vmatpush.xpose.msra.mxu0 0.0
    %517 = vmatpush.xpose.msra.mxu0 %v501
    %518 = vmatpush.xpose.msra.mxu0 %v499
    %519 = vmatmul.f32.gmra.mxu0 %v495
    %v520 = vpop.f32.mrf.mxu0
    %v521 = vadd.f32 0.0, %v520
    %522 = vmatmul.f32.gmra.mxu0 %v497
    %v523 = vpop.f32.mrf.mxu0
    %v524 = vadd.f32 0.0, %v523
    %525 = vdwg.mxu0
    %v526 = vsel %vm376, %v521, -inf
    %527 = vmax.xlane.f32.xlu0 %v526
    %v528 = vpop.xlane.xlu0 %527
    %v529 = vsel %vm376, %v524, -inf
    %530 = vmax.xlane.f32.xlu0 %v529
    %v531 = vpop.xlane.xlu0 %530
    %v532 = vsub.f32 %v521, %v528
    %v533 = vsub.f32 %v524, %v531
    %v534 = vmul.f32 %v532, 1.442695
    %v535 = vpow.pop %v534
    %v536 = vmul.f32 %v533, 1.442695
    %v537 = vpow.pop %v536
    %v538 = vsel %vm376, %v535, 0.0
    %539 = vadd.xlane.f32.xlu0 %v538
    %v540 = vpop.xlane.xlu0 %539
    %v541 = vsel %vm376, %v537, 0.0
    %542 = vadd.xlane.f32.xlu0 %v541
    %v543 = vpop.xlane.xlu0 %542
    %v544 = vrcp.pop %v540
    %v545 = vmul.f32 %v540, %v544
    %v546 = vsub.f32 1.0, %v545
    %v547 = vmul.f32 %v544, %v546
    %v548 = vadd.f32 %v544, %v547
    %vm549 = vweird.f32 %v540
    %vm550 = vweird.f32 %v544
    %vm551 = vmor %vm549, %vm550
    %v552 = vsel %vm551, %v544, %v548
    %v553 = vand.u32 2147483647, %v540
    %vm554 = vcmp.eq.f32.partialorder %v553, 8.507059e+37
    %v555 = vand.u32 %v540, 2147483648
    %v556 = vor.u32 1.1754944e-38, %v555
    %v557 = vsel %vm554, %v556, %v552
    %v558 = vmul.f32 %v535, %v557
    %v559 = vrcp.pop %v543
    %v560 = vmul.f32 %v543, %v559
    %v561 = vsub.f32 1.0, %v560
    %v562 = vmul.f32 %v559, %v561
    %v563 = vadd.f32 %v559, %v562
    %vm564 = vweird.f32 %v543
    %vm565 = vweird.f32 %v559
    %vm566 = vmor %vm564, %vm565
    %v567 = vsel %vm566, %v559, %v563
    %v568 = vand.u32 2147483647, %v543
    %vm569 = vcmp.eq.f32.partialorder %v568, 8.507059e+37
    %v570 = vand.u32 %v543, 2147483648
    %v571 = vor.u32 1.1754944e-38, %v570
    %v572 = vsel %vm569, %v571, %v567
    %v573 = vmul.f32 %v537, %v572
    %576 = vrot.lane.b32.xlu0 %v365, 112
    %v577 = vpop.permute.xlu0 %576
    %578 = vrot.lane.b32.xlu0 %v368, 112
    %v579 = vpop.permute.xlu0 %578
    %v583 = vsel %vm376, %v558, 0
    %v586 = vsel %vm376, %v573, 0
    %588 = vmatpush.msra.mxu0 0.0
    %589 = vmatpush.msra.mxu0 0.0
    %590 = vmatpush.msra.mxu0 0.0
    %591 = vmatpush.msra.mxu0 0.0
    %592 = vmatpush.msra.mxu0 0.0
    %593 = vmatpush.msra.mxu0 0.0
    %594 = vmatpush.msra.mxu0 0.0
    %595 = vmatpush.msra.mxu0 0.0
    %596 = vmatpush.msra.mxu0 0.0
    %597 = vmatpush.msra.mxu0 0.0
    %598 = vmatpush.msra.mxu0 0.0
    %599 = vmatpush.msra.mxu0 0.0
    %600 = vmatpush.msra.mxu0 0.0
    %601 = vmatpush.msra.mxu0 0.0
    %602 = vmatpush.msra.mxu0 %v579
    %603 = vmatpush.msra.mxu0 %v577
    %604 = vmatmul.f32.gmra.mxu0 %v583
    %v605 = vpop.f32.mrf.mxu0
    %v606 = vadd.f32 0.0, %v605
    %607 = vmatmul.f32.gmra.mxu0 %v586
    %v608 = vpop.f32.mrf.mxu0
    %v609 = vadd.f32 0.0, %v608
    %610 = vdwg.mxu0
    %613 = vrot.lane.b32.xlu0 %v606, 16
    %v614 = vpop.permute.xlu0 %613
    %615 = vrot.lane.b32.xlu0 %v609, 16
    %v616 = vpop.permute.xlu0 %615
    %vm619 = vcmask 261248
    %620 = vst.msk [vmem:[#allocation3] sm:$0xff] %vm619, %v614
    %621 = vst.msk [vmem:[#allocation3 + $0x8] sm:$0xff] %vm619, %v616
    %622 = vrot.lane.b32.xlu0 %v342, 96
    %v623 = vpop.permute.xlu0 %622
    %624 = vrot.lane.b32.xlu0 %v345, 96
    %v625 = vpop.permute.xlu0 %624
    %626 = vrot.lane.b32.xlu0 %v342, 32
    %v627 = vpop.permute.xlu0 %626
    %628 = vrot.lane.b32.xlu0 %v345, 32
    %v629 = vpop.permute.xlu0 %628
    %v630 = vsel %vm376, %v623, 0
    %v632 = vsel %vm376, %v625, 0
    %v634 = vsel %vm376, %v627, 0
    %v636 = vsel %vm376, %v629, 0
    %638 = vmatpush.xpose.msra.mxu0 0.0
    %639 = vmatpush.xpose.msra.mxu0 0.0
    %640 = vmatpush.xpose.msra.mxu0 0.0
    %641 = vmatpush.xpose.msra.mxu0 0.0
    %642 = vmatpush.xpose.msra.mxu0 0.0
    %643 = vmatpush.xpose.msra.mxu0 0.0
    %644 = vmatpush.xpose.msra.mxu0 0.0
    %645 = vmatpush.xpose.msra.mxu0 0.0
    %646 = vmatpush.xpose.msra.mxu0 0.0
    %647 = vmatpush.xpose.msra.mxu0 0.0
    %648 = vmatpush.xpose.msra.mxu0 0.0
    %649 = vmatpush.xpose.msra.mxu0 0.0
    %650 = vmatpush.xpose.msra.mxu0 0.0
    %651 = vmatpush.xpose.msra.mxu0 0.0
    %652 = vmatpush.xpose.msra.mxu0 %v636
    %653 = vmatpush.xpose.msra.mxu0 %v634
    %654 = vmatmul.f32.gmra.mxu0 %v630
    %v655 = vpop.f32.mrf.mxu0
    %v656 = vadd.f32 0.0, %v655
    %657 = vmatmul.f32.gmra.mxu0 %v632
    %v658 = vpop.f32.mrf.mxu0
    %v659 = vadd.f32 0.0, %v658
    %660 = vdwg.mxu0
    %v661 = vsel %vm376, %v656, -inf
    %662 = vmax.xlane.f32.xlu0 %v661
    %v663 = vpop.xlane.xlu0 %662
    %v664 = vsel %vm376, %v659, -inf
    %665 = vmax.xlane.f32.xlu0 %v664
    %v666 = vpop.xlane.xlu0 %665
    %v667 = vsub.f32 %v656, %v663
    %v668 = vsub.f32 %v659, %v666
    %v669 = vmul.f32 %v667, 1.442695
    %v670 = vpow.pop %v669
    %v671 = vmul.f32 %v668, 1.442695
    %v672 = vpow.pop %v671
    %v673 = vsel %vm376, %v670, 0.0
    %674 = vadd.xlane.f32.xlu0 %v673
    %v675 = vpop.xlane.xlu0 %674
    %v676 = vsel %vm376, %v672, 0.0
    %677 = vadd.xlane.f32.xlu0 %v676
    %v678 = vpop.xlane.xlu0 %677
    %v679 = vrcp.pop %v675
    %v680 = vmul.f32 %v675, %v679
    %v681 = vsub.f32 1.0, %v680
    %v682 = vmul.f32 %v679, %v681
    %v683 = vadd.f32 %v679, %v682
    %vm684 = vweird.f32 %v675
    %vm685 = vweird.f32 %v679
    %vm686 = vmor %vm684, %vm685
    %v687 = vsel %vm686, %v679, %v683
    %v688 = vand.u32 2147483647, %v675
    %vm689 = vcmp.eq.f32.partialorder %v688, 8.507059e+37
    %v690 = vand.u32 %v675, 2147483648
    %v691 = vor.u32 1.1754944e-38, %v690
    %v692 = vsel %vm689, %v691, %v687
    %v693 = vmul.f32 %v670, %v692
    %v694 = vrcp.pop %v678
    %v695 = vmul.f32 %v678, %v694
    %v696 = vsub.f32 1.0, %v695
    %v697 = vmul.f32 %v694, %v696
    %v698 = vadd.f32 %v694, %v697
    %vm699 = vweird.f32 %v678
    %vm700 = vweird.f32 %v694
    %vm701 = vmor %vm699, %vm700
    %v702 = vsel %vm701, %v694, %v698
    %v703 = vand.u32 2147483647, %v678
    %vm704 = vcmp.eq.f32.partialorder %v703, 8.507059e+37
    %v705 = vand.u32 %v678, 2147483648
    %v706 = vor.u32 1.1754944e-38, %v705
    %v707 = vsel %vm704, %v706, %v702
    %v708 = vmul.f32 %v672, %v707
    %709 = vrot.lane.b32.xlu0 %v365, 96
    %v710 = vpop.permute.xlu0 %709
    %711 = vrot.lane.b32.xlu0 %v368, 96
    %v712 = vpop.permute.xlu0 %711
    %v716 = vsel %vm376, %v693, 0
    %v719 = vsel %vm376, %v708, 0
    %721 = vmatpush.msra.mxu0 0.0
    %722 = vmatpush.msra.mxu0 0.0
    %723 = vmatpush.msra.mxu0 0.0
    %724 = vmatpush.msra.mxu0 0.0
    %725 = vmatpush.msra.mxu0 0.0
    %726 = vmatpush.msra.mxu0 0.0
    %727 = vmatpush.msra.mxu0 0.0
    %728 = vmatpush.msra.mxu0 0.0
    %729 = vmatpush.msra.mxu0 0.0
    %730 = vmatpush.msra.mxu0 0.0
    %731 = vmatpush.msra.mxu0 0.0
    %732 = vmatpush.msra.mxu0 0.0
    %733 = vmatpush.msra.mxu0 0.0
    %734 = vmatpush.msra.mxu0 0.0
    %735 = vmatpush.msra.mxu0 %v712
    %736 = vmatpush.msra.mxu0 %v710
    %737 = vmatmul.f32.gmra.mxu0 %v716
    %v738 = vpop.f32.mrf.mxu0
    %v739 = vadd.f32 0.0, %v738
    %740 = vmatmul.f32.gmra.mxu0 %v719
    %v741 = vpop.f32.mrf.mxu0
    %v742 = vadd.f32 0.0, %v741
    %743 = vdwg.mxu0
    %746 = vrot.lane.b32.xlu0 %v739, 32
    %v747 = vpop.permute.xlu0 %746
    %748 = vrot.lane.b32.xlu0 %v742, 32
    %v749 = vpop.permute.xlu0 %748
    %vm752 = vcmask 392448
    %753 = vst.msk [vmem:[#allocation3] sm:$0xff] %vm752, %v747
    %754 = vst.msk [vmem:[#allocation3 + $0x8] sm:$0xff] %vm752, %v749
    %755 = vrot.lane.b32.xlu0 %v342, 80
    %v756 = vpop.permute.xlu0 %755
    %757 = vrot.lane.b32.xlu0 %v345, 80
    %v758 = vpop.permute.xlu0 %757
    %759 = vrot.lane.b32.xlu0 %v342, 16
    %v760 = vpop.permute.xlu0 %759
    %761 = vrot.lane.b32.xlu0 %v345, 16
    %v762 = vpop.permute.xlu0 %761
    %v763 = vsel %vm376, %v756, 0
    %v765 = vsel %vm376, %v758, 0
    %v767 = vsel %vm376, %v760, 0
    %v769 = vsel %vm376, %v762, 0
    %771 = vmatpush.xpose.msra.mxu0 0.0
    %772 = vmatpush.xpose.msra.mxu0 0.0
    %773 = vmatpush.xpose.msra.mxu0 0.0
    %774 = vmatpush.xpose.msra.mxu0 0.0
    %775 = vmatpush.xpose.msra.mxu0 0.0
    %776 = vmatpush.xpose.msra.mxu0 0.0
    %777 = vmatpush.xpose.msra.mxu0 0.0
    %778 = vmatpush.xpose.msra.mxu0 0.0
    %779 = vmatpush.xpose.msra.mxu0 0.0
    %780 = vmatpush.xpose.msra.mxu0 0.0
    %781 = vmatpush.xpose.msra.mxu0 0.0
    %782 = vmatpush.xpose.msra.mxu0 0.0
    %783 = vmatpush.xpose.msra.mxu0 0.0
    %784 = vmatpush.xpose.msra.mxu0 0.0
    %785 = vmatpush.xpose.msra.mxu0 %v769
    %786 = vmatpush.xpose.msra.mxu0 %v767
    %787 = vmatmul.f32.gmra.mxu0 %v763
    %v788 = vpop.f32.mrf.mxu0
    %v789 = vadd.f32 0.0, %v788
    %790 = vmatmul.f32.gmra.mxu0 %v765
    %v791 = vpop.f32.mrf.mxu0
    %v792 = vadd.f32 0.0, %v791
    %793 = vdwg.mxu0
    %v794 = vsel %vm376, %v789, -inf
    %795 = vmax.xlane.f32.xlu0 %v794
    %v796 = vpop.xlane.xlu0 %795
    %v797 = vsel %vm376, %v792, -inf
    %798 = vmax.xlane.f32.xlu0 %v797
    %v799 = vpop.xlane.xlu0 %798
    %v800 = vsub.f32 %v789, %v796
    %v801 = vsub.f32 %v792, %v799
    %v802 = vmul.f32 %v800, 1.442695
    %v803 = vpow.pop %v802
    %v804 = vmul.f32 %v801, 1.442695
    %v805 = vpow.pop %v804
    %v806 = vsel %vm376, %v803, 0.0
    %807 = vadd.xlane.f32.xlu0 %v806
    %v808 = vpop.xlane.xlu0 %807
    %v809 = vsel %vm376, %v805, 0.0
    %810 = vadd.xlane.f32.xlu0 %v809
    %v811 = vpop.xlane.xlu0 %810
    %v812 = vrcp.pop %v808
    %v813 = vmul.f32 %v808, %v812
    %v814 = vsub.f32 1.0, %v813
    %v815 = vmul.f32 %v812, %v814
    %v816 = vadd.f32 %v812, %v815
    %vm817 = vweird.f32 %v808
    %vm818 = vweird.f32 %v812
    %vm819 = vmor %vm817, %vm818
    %v820 = vsel %vm819, %v812, %v816
    %v821 = vand.u32 2147483647, %v808
    %vm822 = vcmp.eq.f32.partialorder %v821, 8.507059e+37
    %v823 = vand.u32 %v808, 2147483648
    %v824 = vor.u32 1.1754944e-38, %v823
    %v825 = vsel %vm822, %v824, %v820
    %v826 = vmul.f32 %v803, %v825
    %v827 = vrcp.pop %v811
    %v828 = vmul.f32 %v811, %v827
    %v829 = vsub.f32 1.0, %v828
    %v830 = vmul.f32 %v827, %v829
    %v831 = vadd.f32 %v827, %v830
    %vm832 = vweird.f32 %v811
    %vm833 = vweird.f32 %v827
    %vm834 = vmor %vm832, %vm833
    %v835 = vsel %vm834, %v827, %v831
    %v836 = vand.u32 2147483647, %v811
    %vm837 = vcmp.eq.f32.partialorder %v836, 8.507059e+37
    %v838 = vand.u32 %v811, 2147483648
    %v839 = vor.u32 1.1754944e-38, %v838
    %v840 = vsel %vm837, %v839, %v835
    %v841 = vmul.f32 %v805, %v840
    %842 = vrot.lane.b32.xlu0 %v365, 80
    %v843 = vpop.permute.xlu0 %842
    %844 = vrot.lane.b32.xlu0 %v368, 80
    %v845 = vpop.permute.xlu0 %844
    %v849 = vsel %vm376, %v826, 0
    %v852 = vsel %vm376, %v841, 0
    %854 = vmatpush.msra.mxu0 0.0
    %855 = vmatpush.msra.mxu0 0.0
    %856 = vmatpush.msra.mxu0 0.0
    %857 = vmatpush.msra.mxu0 0.0
    %858 = vmatpush.msra.mxu0 0.0
    %859 = vmatpush.msra.mxu0 0.0
    %860 = vmatpush.msra.mxu0 0.0
    %861 = vmatpush.msra.mxu0 0.0
    %862 = vmatpush.msra.mxu0 0.0
    %863 = vmatpush.msra.mxu0 0.0
    %864 = vmatpush.msra.mxu0 0.0
    %865 = vmatpush.msra.mxu0 0.0
    %866 = vmatpush.msra.mxu0 0.0
    %867 = vmatpush.msra.mxu0 0.0
    %868 = vmatpush.msra.mxu0 %v845
    %869 = vmatpush.msra.mxu0 %v843
    %870 = vmatmul.f32.gmra.mxu0 %v849
    %v871 = vpop.f32.mrf.mxu0
    %v872 = vadd.f32 0.0, %v871
    %873 = vmatmul.f32.gmra.mxu0 %v852
    %v874 = vpop.f32.mrf.mxu0
    %v875 = vadd.f32 0.0, %v874
    %876 = vdwg.mxu0
    %879 = vrot.lane.b32.xlu0 %v872, 48
    %v880 = vpop.permute.xlu0 %879
    %881 = vrot.lane.b32.xlu0 %v875, 48
    %v882 = vpop.permute.xlu0 %881
    %vm885 = vcmask 523648
    %886 = vst.msk [vmem:[#allocation3] sm:$0xff] %vm885, %v880
    %887 = vst.msk [vmem:[#allocation3 + $0x8] sm:$0xff] %vm885, %v882
    %v888 = vld [vmem:[#allocation3] sm:$0xff]
    %v889 = vld [vmem:[#allocation3 + $0x8] sm:$0xff]
    %v890 = vld [vmem:[%s12] sm:$0xff]
    %v891 = vld [vmem:[%s12 + $0x8] sm:$0xff]
    %v892 = vld [vmem:[%s12 + $0x10] sm:$0xff]
    %v893 = vld [vmem:[%s12 + $0x18] sm:$0xff]
    %v894 = vld [vmem:[%s12 + $0x20] sm:$0xff]
    %v895 = vld [vmem:[%s12 + $0x28] sm:$0xff]
    %v896 = vld [vmem:[%s12 + $0x30] sm:$0xff]
    %v897 = vld [vmem:[%s12 + $0x38] sm:$0xff]
    %v898 = vld [vmem:[%s13] sm:$0x1]
    %v900 = vperm.slane %v898, 0
    %v903 = vsel %vm288, %v888, 0
    %v906 = vsel %vm288, %v889, 0
    %908 = vmatpush.msra.mxu0 0.0
    %909 = vmatpush.msra.mxu0 0.0
    %910 = vmatpush.msra.mxu0 0.0
    %911 = vmatpush.msra.mxu0 0.0
    %912 = vmatpush.msra.mxu0 0.0
    %913 = vmatpush.msra.mxu0 0.0
    %914 = vmatpush.msra.mxu0 0.0
    %915 = vmatpush.msra.mxu0 0.0
    %916 = vmatpush.msra.mxu0 %v897
    %917 = vmatpush.msra.mxu0 %v896
    %918 = vmatpush.msra.mxu0 %v895
    %919 = vmatpush.msra.mxu0 %v894
    %920 = vmatpush.msra.mxu0 %v893
    %921 = vmatpush.msra.mxu0 %v892
    %922 = vmatpush.msra.mxu0 %v891
    %923 = vmatpush.msra.mxu0 %v890
    %924 = vmatmul.f32.gmra.mxu0 %v903
    %v925 = vpop.f32.mrf.mxu0
    %v926 = vadd.f32 %v900, %v925
    %927 = vmatmul.f32.gmra.mxu0 %v906
    %v928 = vpop.f32.mrf.mxu0
    %v929 = vadd.f32 %v900, %v928
    %930 = vdwg.mxu0
    %v931 = vadd.f32 %v294, %v926
    %v932 = vadd.f32 %v295, %v929
    %v933 = vld [vmem:[%s14] sm:$0x1]
    %v934 = vld [vmem:[#allocation10] sm:$0x1]
    %v935 = vsel %vm288, %v931, 0.0
    %936 = vadd.xlane.f32.xlu0 %v935
    %v937 = vpop.xlane.xlu0 %936
    %v938 = vsel %vm288, %v932, 0.0
    %939 = vadd.xlane.f32.xlu0 %v938
    %v940 = vpop.xlane.xlu0 %939
    %v941 = vrcp.pop 64.0
    %v942 = vmul.f32 64.0, %v941
    %v943 = vsub.f32 1.0, %v942
    %v944 = vmul.f32 %v941, %v943
    %v945 = vadd.f32 %v941, %v944
    %vm946 = vweird.f32 %v941
    %v947 = vsel %vm946, %v941, %v945
    %v948 = vmul.f32 %v937, %v947
    %v949 = vmul.f32 %v940, %v947
    %v950 = vsub.f32 %v931, %v948
    %v951 = vsub.f32 %v932, %v949
    %v952 = vmul.f32 %v950, %v950
    %v953 = vmul.f32 %v951, %v951
    %v954 = vsel %vm288, %v952, 0.0
    %955 = vadd.xlane.f32.xlu0 %v954
    %v956 = vpop.xlane.xlu0 %955
    %v957 = vsel %vm288, %v953, 0.0
    %958 = vadd.xlane.f32.xlu0 %v957
    %v959 = vpop.xlane.xlu0 %958
    %v960 = vmul.f32 %v956, %v947
    %v961 = vmul.f32 %v959, %v947
    %v962 = vadd.f32 %v960, 1e-05
    %v963 = vadd.f32 %v961, 1e-05
    %v964 = vrsqrt.pop %v962
    %v965 = vmul.f32 %v964, %v962
    %v966 = vmul.f32 %v965, %v964
    %v967 = vmul.f32 0.5, %v966
    %v968 = vsub.f32 1.5, %v967
    %v969 = vmul.f32 %v964, %v968
    %vm970 = vweird.f32 %v962
    %vm971 = vweird.f32 %v964
    %vm972 = vmor %vm970, %vm971
    %v973 = vsel %vm972, %v964, %v969
    %v974 = vrsqrt.pop %v963
    %v975 = vmul.f32 %v974, %v963
    %v976 = vmul.f32 %v975, %v974
    %v977 = vmul.f32 0.5, %v976
    %v978 = vsub.f32 1.5, %v977
    %v979 = vmul.f32 %v974, %v978
    %vm980 = vweird.f32 %v963
    %vm981 = vweird.f32 %v974
    %vm982 = vmor %vm980, %vm981
    %v983 = vsel %vm982, %v974, %v979
    %v984 = vmul.f32 %v950, %v973
    %v985 = vmul.f32 %v951, %v983
    %v987 = vperm.slane %v933, 0
    %v989 = vmul.f32 %v984, %v987
    %v990 = vmul.f32 %v985, %v987
    %v992 = vperm.slane %v934, 0
    %v994 = vadd.f32 %v989, %v992
    %v995 = vadd.f32 %v990, %v992
    %v996 = vld [vmem:[#allocation12] sm:$0xff]
    %v997 = vld [vmem:[#allocation12 + $0x8] sm:$0xff]
    %v998 = vld [vmem:[#allocation12 + $0x10] sm:$0xff]
    %v999 = vld [vmem:[#allocation12 + $0x18] sm:$0xff]
    %v1000 = vld [vmem:[#allocation12 + $0x20] sm:$0xff]
    %v1001 = vld [vmem:[#allocation12 + $0x28] sm:$0xff]
    %v1002 = vld [vmem:[#allocation12 + $0x30] sm:$0xff]
    %v1003 = vld [vmem:[#allocation12 + $0x38] sm:$0xff]
    %v1004 = vld [vmem:[#allocation13] sm:$0x1]
    %v1006 = vperm.slane %v1004, 0
    %v1009 = vsel %vm288, %v994, 0
    %v1012 = vsel %vm288, %v995, 0
    %1014 = vmatpush.msra.mxu0 0.0
    %1015 = vmatpush.msra.mxu0 0.0
    %1016 = vmatpush.msra.mxu0 0.0
    %1017 = vmatpush.msra.mxu0 0.0
    %1018 = vmatpush.msra.mxu0 0.0
    %1019 = vmatpush.msra.mxu0 0.0
    %1020 = vmatpush.msra.mxu0 0.0
    %1021 = vmatpush.msra.mxu0 0.0
    %1022 = vmatpush.msra.mxu0 %v1003
    %1023 = vmatpush.msra.mxu0 %v1002
    %1024 = vmatpush.msra.mxu0 %v1001
    %1025 = vmatpush.msra.mxu0 %v1000
    %1026 = vmatpush.msra.mxu0 %v999
    %1027 = vmatpush.msra.mxu0 %v998
    %1028 = vmatpush.msra.mxu0 %v997
    %1029 = vmatpush.msra.mxu0 %v996
    %1030 = vmatmul.f32.gmra.mxu0 %v1009
    %v1031 = vpop.f32.mrf.mxu0
    %v1032 = vadd.f32 %v1006, %v1031
    %1033 = vmatmul.f32.gmra.mxu0 %v1012
    %v1034 = vpop.f32.mrf.mxu0
    %v1035 = vadd.f32 %v1006, %v1034
    %1036 = vdwg.mxu0
    %v1037 = vmax.f32 %v1032, 0.0
    %v1038 = vmax.f32 %v1035, 0.0
    %v1039 = vld [vmem:[%s18] sm:$0xff]
    %v1040 = vld [vmem:[%s18 + $0x8] sm:$0xff]
    %v1041 = vld [vmem:[%s18 + $0x10] sm:$0xff]
    %v1042 = vld [vmem:[%s18 + $0x18] sm:$0xff]
    %v1043 = vld [vmem:[%s18 + $0x20] sm:$0xff]
    %v1044 = vld [vmem:[%s18 + $0x28] sm:$0xff]
    %v1045 = vld [vmem:[%s18 + $0x30] sm:$0xff]
    %v1046 = vld [vmem:[%s18 + $0x38] sm:$0xff]
    %v1047 = vld [vmem:[%s18 + $0x40] sm:$0xff]
    %v1048 = vld [vmem:[%s18 + $0x48] sm:$0xff]
    %v1049 = vld [vmem:[%s18 + $0x50] sm:$0xff]
    %v1050 = vld [vmem:[%s18 + $0x58] sm:$0xff]
    %v1051 = vld [vmem:[%s18 + $0x60] sm:$0xff]
    %v1052 = vld [vmem:[%s18 + $0x68] sm:$0xff]
    %v1053 = vld [vmem:[%s18 + $0x70] sm:$0xff]
    %v1054 = vld [vmem:[%s18 + $0x78] sm:$0xff]
    %v1055 = vld [vmem:[#allocation15] sm:$0x1]
    %v1057 = vperm.slane %v1055, 0
    %1059 = vmatpush.msra.mxu0 %v1054
    %1060 = vmatpush.msra.mxu0 %v1053
    %1061 = vmatpush.msra.mxu0 %v1052
    %1062 = vmatpush.msra.mxu0 %v1051
    %1063 = vmatpush.msra.mxu0 %v1050
    %1064 = vmatpush.msra.mxu0 %v1049
    %1065 = vmatpush.msra.mxu0 %v1048
    %1066 = vmatpush.msra.mxu0 %v1047
    %1067 = vmatpush.msra.mxu0 %v1046
    %1068 = vmatpush.msra.mxu0 %v1045
    %1069 = vmatpush.msra.mxu0 %v1044
    %1070 = vmatpush.msra.mxu0 %v1043
    %1071 = vmatpush.msra.mxu0 %v1042
    %1072 = vmatpush.msra.mxu0 %v1041
    %1073 = vmatpush.msra.mxu0 %v1040
    %1074 = vmatpush.msra.mxu0 %v1039
    %1075 = vmatmul.f32.gmra.mxu0 %v1037
    %v1076 = vpop.f32.mrf.mxu0
    %v1077 = vadd.f32 %v1057, %v1076
    %1078 = vmatmul.f32.gmra.mxu0 %v1038
    %v1079 = vpop.f32.mrf.mxu0
    %v1080 = vadd.f32 %v1057, %v1079
    %1081 = vdwg.mxu0
    %v1082 = vadd.f32 %v994, %v1077
    %v1083 = vadd.f32 %v995, %v1080
    %v1084 = vld [vmem:[%s20] sm:$0x1]
    %v1085 = vld [vmem:[%s21] sm:$0x1]
    %v1086 = vsel %vm288, %v1082, 0.0
    %1087 = vadd.xlane.f32.xlu0 %v1086
    %v1088 = vpop.xlane.xlu0 %1087
    %v1089 = vsel %vm288, %v1083, 0.0
    %1090 = vadd.xlane.f32.xlu0 %v1089
    %v1091 = vpop.xlane.xlu0 %1090
    %v1092 = vmul.f32 %v1088, %v947
    %v1093 = vmul.f32 %v1091, %v947
    %v1094 = vsub.f32 %v1082, %v1092
    %v1095 = vsub.f32 %v1083, %v1093
    %v1096 = vmul.f32 %v1094, %v1094
    %v1097 = vmul.f32 %v1095, %v1095
    %v1098 = vsel %vm288, %v1096, 0.0
    %1099 = vadd.xlane.f32.xlu0 %v1098
    %v1100 = vpop.xlane.xlu0 %1099
    %v1101 = vsel %vm288, %v1097, 0.0
    %1102 = vadd.xlane.f32.xlu0 %v1101
    %v1103 = vpop.xlane.xlu0 %1102
    %v1104 = vmul.f32 %v1100, %v947
    %v1105 = vmul.f32 %v1103, %v947
    %v1106 = vadd.f32 %v1104, 1e-05
    %v1107 = vadd.f32 %v1105, 1e-05
    %v1108 = vrsqrt.pop %v1106
    %v1109 = vmul.f32 %v1108, %v1106
    %v1110 = vmul.f32 %v1109, %v1108
    %v1111 = vmul.f32 0.5, %v1110
    %v1112 = vsub.f32 1.5, %v1111
    %v1113 = vmul.f32 %v1108, %v1112
    %vm1114 = vweird.f32 %v1106
    %vm1115 = vweird.f32 %v1108
    %vm1116 = vmor %vm1114, %vm1115
    %v1117 = vsel %vm1116, %v1108, %v1113
    %v1118 = vrsqrt.pop %v1107
    %v1119 = vmul.f32 %v1118, %v1107
    %v1120 = vmul.f32 %v1119, %v1118
    %v1121 = vmul.f32 0.5, %v1120
    %v1122 = vsub.f32 1.5, %v1121
    %v1123 = vmul.f32 %v1118, %v1122
    %vm1124 = vweird.f32 %v1107
    %vm1125 = vweird.f32 %v1118
    %vm1126 = vmor %vm1124, %vm1125
    %v1127 = vsel %vm1126, %v1118, %v1123
    %v1128 = vmul.f32 %v1094, %v1117
    %v1129 = vmul.f32 %v1095, %v1127
    %v1131 = vperm.slane %v1084, 0
    %v1133 = vmul.f32 %v1128, %v1131
    %v1134 = vmul.f32 %v1129, %v1131
    %v1136 = vperm.slane %v1085, 0
    %v1138 = vadd.f32 %v1133, %v1136
    %v1139 = vadd.f32 %v1134, %v1136
    %s1140 = scalar_lea.vmem %s10, 128
    %v1141 = vld [vmem:[%s1140] sm:$0xff]
    %v1142 = vld [vmem:[%s1140 + $0x8] sm:$0xff]
    %v1143 = vld [vmem:[%s1140 + $0x10] sm:$0xff]
    %v1144 = vld [vmem:[%s1140 + $0x18] sm:$0xff]
    %v1145 = vld [vmem:[%s1140 + $0x20] sm:$0xff]
    %v1146 = vld [vmem:[%s1140 + $0x28] sm:$0xff]
    %v1147 = vld [vmem:[%s1140 + $0x30] sm:$0xff]
    %v1148 = vld [vmem:[%s1140 + $0x38] sm:$0xff]
    %v1149 = vld [vmem:[%s1140 + $0x40] sm:$0xff]
    %v1150 = vld [vmem:[%s1140 + $0x48] sm:$0xff]
    %v1151 = vld [vmem:[%s1140 + $0x50] sm:$0xff]
    %v1152 = vld [vmem:[%s1140 + $0x58] sm:$0xff]
    %v1153 = vld [vmem:[%s1140 + $0x60] sm:$0xff]
    %v1154 = vld [vmem:[%s1140 + $0x68] sm:$0xff]
    %v1155 = vld [vmem:[%s1140 + $0x70] sm:$0xff]
    %v1156 = vld [vmem:[%s1140 + $0x78] sm:$0xff]
    %s1157 = scalar_lea.vmem [#allocation9], 2
    %v1158 = vld [vmem:[%s1157] sm:$0x3]
    %v1160 = vperm.slane %v1158, 0
    %v1161 = vperm.slane %v1158, 1
    %v1165 = vsel %vm288, %v1138, 0
    %v1168 = vsel %vm288, %v1139, 0
    %1170 = vmatpush.msra.mxu0 0.0
    %1171 = vmatpush.msra.mxu0 0.0
    %1172 = vmatpush.msra.mxu0 0.0
    %1173 = vmatpush.msra.mxu0 0.0
    %1174 = vmatpush.msra.mxu0 0.0
    %1175 = vmatpush.msra.mxu0 0.0
    %1176 = vmatpush.msra.mxu0 0.0
    %1177 = vmatpush.msra.mxu0 0.0
    %1178 = vmatpush.msra.mxu0 %v1155
    %1179 = vmatpush.msra.mxu0 %v1153
    %1180 = vmatpush.msra.mxu0 %v1151
    %1181 = vmatpush.msra.mxu0 %v1149
    %1182 = vmatpush.msra.mxu0 %v1147
    %1183 = vmatpush.msra.mxu0 %v1145
    %1184 = vmatpush.msra.mxu0 %v1143
    %1185 = vmatpush.msra.mxu0 %v1141
    %1186 = vmatmul.f32.gmra.mxu0 %v1165
    %v1187 = vpop.f32.mrf.mxu0
    %v1188 = vadd.f32 %v1160, %v1187
    %1189 = vmatmul.f32.gmra.mxu0 %v1168
    %v1190 = vpop.f32.mrf.mxu0
    %v1191 = vadd.f32 %v1160, %v1190
    %1192 = vdwg.mxu0
    %1193 = vmatpush.msra.mxu0 0.0
    %1194 = vmatpush.msra.mxu0 0.0
    %1195 = vmatpush.msra.mxu0 0.0
    %1196 = vmatpush.msra.mxu0 0.0
    %1197 = vmatpush.msra.mxu0 0.0
    %1198 = vmatpush.msra.mxu0 0.0
    %1199 = vmatpush.msra.mxu0 0.0
    %1200 = vmatpush.msra.mxu0 0.0
    %1201 = vmatpush.msra.mxu0 %v1156
    %1202 = vmatpush.msra.mxu0 %v1154
    %1203 = vmatpush.msra.mxu0 %v1152
    %1204 = vmatpush.msra.mxu0 %v1150
    %1205 = vmatpush.msra.mxu0 %v1148
    %1206 = vmatpush.msra.mxu0 %v1146
    %1207 = vmatpush.msra.mxu0 %v1144
    %1208 = vmatpush.msra.mxu0 %v1142
    %1209 = vmatmul.f32.gmra.mxu0 %v1165
    %v1210 = vpop.f32.mrf.mxu0
    %v1211 = vadd.f32 %v1161, %v1210
    %1212 = vmatmul.f32.gmra.mxu0 %v1168
    %v1213 = vpop.f32.mrf.mxu0
    %v1214 = vadd.f32 %v1161, %v1213
    %1215 = vdwg.mxu0
    %1218 = vrot.lane.b32.xlu0 %v1188, 64
    %v1219 = vpop.permute.xlu0 %1218
    %1220 = vrot.lane.b32.xlu0 %v1191, 64
    %v1221 = vpop.permute.xlu0 %1220
    %v1222 = vsel %vm376, %v1188, 0
    %v1224 = vsel %vm376, %v1191, 0
    %v1226 = vsel %vm376, %v1219, 0
    %v1228 = vsel %vm376, %v1221, 0
    %1230 = vmatpush.xpose.msra.mxu0 0.0
    %1231 = vmatpush.xpose.msra.mxu0 0.0
    %1232 = vmatpush.xpose.msra.mxu0 0.0
    %1233 = vmatpush.xpose.msra.mxu0 0.0
    %1234 = vmatpush.xpose.msra.mxu0 0.0
    %1235 = vmatpush.xpose.msra.mxu0 0.0
    %1236 = vmatpush.xpose.msra.mxu0 0.0
    %1237 = vmatpush.xpose.msra.mxu0 0.0
    %1238 = vmatpush.xpose.msra.mxu0 0.0
    %1239 = vmatpush.xpose.msra.mxu0 0.0
    %1240 = vmatpush.xpose.msra.mxu0 0.0
    %1241 = vmatpush.xpose.msra.mxu0 0.0
    %1242 = vmatpush.xpose.msra.mxu0 0.0
    %1243 = vmatpush.xpose.msra.mxu0 0.0
    %1244 = vmatpush.xpose.msra.mxu0 %v1228
    %1245 = vmatpush.xpose.msra.mxu0 %v1226
    %1246 = vmatmul.f32.gmra.mxu0 %v1222
    %v1247 = vpop.f32.mrf.mxu0
    %v1248 = vadd.f32 0.0, %v1247
    %1249 = vmatmul.f32.gmra.mxu0 %v1224
    %v1250 = vpop.f32.mrf.mxu0
    %v1251 = vadd.f32 0.0, %v1250
    %1252 = vdwg.mxu0
    %v1253 = vsel %vm376, %v1248, -inf
    %1254 = vmax.xlane.f32.xlu0 %v1253
    %v1255 = vpop.xlane.xlu0 %1254
    %v1256 = vsel %vm376, %v1251, -inf
    %1257 = vmax.xlane.f32.xlu0 %v1256
    %v1258 = vpop.xlane.xlu0 %1257
    %v1259 = vsub.f32 %v1248, %v1255
    %v1260 = vsub.f32 %v1251, %v1258
    %v1261 = vmul.f32 %v1259, 1.442695
    %v1262 = vpow.pop %v1261
    %v1263 = vmul.f32 %v1260, 1.442695
    %v1264 = vpow.pop %v1263
    %v1265 = vsel %vm376, %v1262, 0.0
    %1266 = vadd.xlane.f32.xlu0 %v1265
    %v1267 = vpop.xlane.xlu0 %1266
    %v1268 = vsel %vm376, %v1264, 0.0
    %1269 = vadd.xlane.f32.xlu0 %v1268
    %v1270 = vpop.xlane.xlu0 %1269
    %v1271 = vrcp.pop %v1267
    %v1272 = vmul.f32 %v1267, %v1271
    %v1273 = vsub.f32 1.0, %v1272
    %v1274 = vmul.f32 %v1271, %v1273
    %v1275 = vadd.f32 %v1271, %v1274
    %vm1276 = vweird.f32 %v1267
    %vm1277 = vweird.f32 %v1271
    %vm1278 = vmor %vm1276, %vm1277
    %v1279 = vsel %vm1278, %v1271, %v1275
    %v1280 = vand.u32 2147483647, %v1267
    %vm1281 = vcmp.eq.f32.partialorder %v1280, 8.507059e+37
    %v1282 = vand.u32 %v1267, 2147483648
    %v1283 = vor.u32 1.1754944e-38, %v1282
    %v1284 = vsel %vm1281, %v1283, %v1279
    %v1285 = vmul.f32 %v1262, %v1284
    %v1286 = vrcp.pop %v1270
    %v1287 = vmul.f32 %v1270, %v1286
    %v1288 = vsub.f32 1.0, %v1287
    %v1289 = vmul.f32 %v1286, %v1288
    %v1290 = vadd.f32 %v1286, %v1289
    %vm1291 = vweird.f32 %v1270
    %vm1292 = vweird.f32 %v1286
    %vm1293 = vmor %vm1291, %vm1292
    %v1294 = vsel %vm1293, %v1286, %v1290
    %v1295 = vand.u32 2147483647, %v1270
    %vm1296 = vcmp.eq.f32.partialorder %v1295, 8.507059e+37
    %v1297 = vand.u32 %v1270, 2147483648
    %v1298 = vor.u32 1.1754944e-38, %v1297
    %v1299 = vsel %vm1296, %v1298, %v1294
    %v1300 = vmul.f32 %v1264, %v1299
    %v1302 = vsel %vm376, %v1285, 0
    %v1305 = vsel %vm376, %v1300, 0
    %1307 = vmatpush.msra.mxu0 0.0
    %1308 = vmatpush.msra.mxu0 0.0
    %1309 = vmatpush.msra.mxu0 0.0
    %1310 = vmatpush.msra.mxu0 0.0
    %1311 = vmatpush.msra.mxu0 0.0
    %1312 = vmatpush.msra.mxu0 0.0
    %1313 = vmatpush.msra.mxu0 0.0
    %1314 = vmatpush.msra.mxu0 0.0
    %1315 = vmatpush.msra.mxu0 0.0
    %1316 = vmatpush.msra.mxu0 0.0
    %1317 = vmatpush.msra.mxu0 0.0
    %1318 = vmatpush.msra.mxu0 0.0
    %1319 = vmatpush.msra.mxu0 0.0
    %1320 = vmatpush.msra.mxu0 0.0
    %1321 = vmatpush.msra.mxu0 %v1214
    %1322 = vmatpush.msra.mxu0 %v1211
    %1323 = vmatmul.f32.gmra.mxu0 %v1302
    %v1324 = vpop.f32.mrf.mxu0
    %v1325 = vadd.f32 0.0, %v1324
    %1326 = vmatmul.f32.gmra.mxu0 %v1305
    %v1327 = vpop.f32.mrf.mxu0
    %v1328 = vadd.f32 0.0, %v1327
    %1329 = vdwg.mxu0
    %1330 = vst.msk [vmem:[#allocation3] sm:$0xff] %vm376, %v1325
    %1331 = vst.msk [vmem:[#allocation3 + $0x8] sm:$0xff] %vm376, %v1328
    %1332 = vrot.lane.b32.xlu0 %v1188, 112
    %v1333 = vpop.permute.xlu0 %1332
    %1334 = vrot.lane.b32.xlu0 %v1191, 112
    %v1335 = vpop.permute.xlu0 %1334
    %1336 = vrot.lane.b32.xlu0 %v1188, 48
    %v1337 = vpop.permute.xlu0 %1336
    %1338 = vrot.lane.b32.xlu0 %v1191, 48
    %v1339 = vpop.permute.xlu0 %1338
    %v1340 = vsel %vm376, %v1333, 0
    %v1342 = vsel %vm376, %v1335, 0
    %v1344 = vsel %vm376, %v1337, 0
    %v1346 = vsel %vm376, %v1339, 0
    %1348 = vmatpush.xpose.msra.mxu0 0.0
    %1349 = vmatpush.xpose.msra.mxu0 0.0
    %1350 = vmatpush.xpose.msra.mxu0 0.0
    %1351 = vmatpush.xpose.msra.mxu0 0.0
    %1352 = vmatpush.xpose.msra.mxu0 0.0
    %1353 = vmatpush.xpose.msra.mxu0 0.0
    %1354 = vmatpush.xpose.msra.mxu0 0.0
    %1355 = vmatpush.xpose.msra.mxu0 0.0
    %1356 = vmatpush.xpose.msra.mxu0 0.0
    %1357 = vmatpush.xpose.msra.mxu0 0.0
    %1358 = vmatpush.xpose.msra.mxu0 0.0
    %1359 = vmatpush.xpose.msra.mxu0 0.0
    %1360 = vmatpush.xpose.msra.mxu0 0.0
    %1361 = vmatpush.xpose.msra.mxu0 0.0
    %1362 = vmatpush.xpose.msra.mxu0 %v1346
    %1363 = vmatpush.xpose.msra.mxu0 %v1344
    %1364 = vmatmul.f32.gmra.mxu0 %v1340
    %v1365 = vpop.f32.mrf.mxu0
    %v1366 = vadd.f32 0.0, %v1365
    %1367 = vmatmul.f32.gmra.mxu0 %v1342
    %v1368 = vpop.f32.mrf.mxu0
    %v1369 = vadd.f32 0.0, %v1368
    %1370 = vdwg.mxu0
    %v1371 = vsel %vm376, %v1366, -inf
    %1372 = vmax.xlane.f32.xlu0 %v1371
    %v1373 = vpop.xlane.xlu0 %1372
    %v1374 = vsel %vm376, %v1369, -inf
    %1375 = vmax.xlane.f32.xlu0 %v1374
    %v1376 = vpop.xlane.xlu0 %1375
    %v1377 = vsub.f32 %v1366, %v1373
    %v1378 = vsub.f32 %v1369, %v1376
    %v1379 = vmul.f32 %v1377, 1.442695
    %v1380 = vpow.pop %v1379
    %v1381 = vmul.f32 %v1378, 1.442695
    %v1382 = vpow.pop %v1381
    %v1383 = vsel %vm376, %v1380, 0.0
    %1384 = vadd.xlane.f32.xlu0 %v1383
    %v1385 = vpop.xlane.xlu0 %1384
    %v1386 = vsel %vm376, %v1382, 0.0
    %1387 = vadd.xlane.f32.xlu0 %v1386
    %v1388 = vpop.xlane.xlu0 %1387
    %v1389 = vrcp.pop %v1385
    %v1390 = vmul.f32 %v1385, %v1389
    %v1391 = vsub.f32 1.0, %v1390
    %v1392 = vmul.f32 %v1389, %v1391
    %v1393 = vadd.f32 %v1389, %v1392
    %vm1394 = vweird.f32 %v1385
    %vm1395 = vweird.f32 %v1389
    %vm1396 = vmor %vm1394, %vm1395
    %v1397 = vsel %vm1396, %v1389, %v1393
    %v1398 = vand.u32 2147483647, %v1385
    %vm1399 = vcmp.eq.f32.partialorder %v1398, 8.507059e+37
    %v1400 = vand.u32 %v1385, 2147483648
    %v1401 = vor.u32 1.1754944e-38, %v1400
    %v1402 = vsel %vm1399, %v1401, %v1397
    %v1403 = vmul.f32 %v1380, %v1402
    %v1404 = vrcp.pop %v1388
    %v1405 = vmul.f32 %v1388, %v1404
    %v1406 = vsub.f32 1.0, %v1405
    %v1407 = vmul.f32 %v1404, %v1406
    %v1408 = vadd.f32 %v1404, %v1407
    %vm1409 = vweird.f32 %v1388
    %vm1410 = vweird.f32 %v1404
    %vm1411 = vmor %vm1409, %vm1410
    %v1412 = vsel %vm1411, %v1404, %v1408
    %v1413 = vand.u32 2147483647, %v1388
    %vm1414 = vcmp.eq.f32.partialorder %v1413, 8.507059e+37
    %v1415 = vand.u32 %v1388, 2147483648
    %v1416 = vor.u32 1.1754944e-38, %v1415
    %v1417 = vsel %vm1414, %v1416, %v1412
    %v1418 = vmul.f32 %v1382, %v1417
    %1421 = vrot.lane.b32.xlu0 %v1211, 112
    %v1422 = vpop.permute.xlu0 %1421
    %1423 = vrot.lane.b32.xlu0 %v1214, 112
    %v1424 = vpop.permute.xlu0 %1423
    %v1428 = vsel %vm376, %v1403, 0
    %v1431 = vsel %vm376, %v1418, 0
    %1433 = vmatpush.msra.mxu0 0.0
    %1434 = vmatpush.msra.mxu0 0.0
    %1435 = vmatpush.msra.mxu0 0.0
    %1436 = vmatpush.msra.mxu0 0.0
    %1437 = vmatpush.msra.mxu0 0.0
    %1438 = vmatpush.msra.mxu0 0.0
    %1439 = vmatpush.msra.mxu0 0.0
    %1440 = vmatpush.msra.mxu0 0.0
    %1441 = vmatpush.msra.mxu0 0.0
    %1442 = vmatpush.msra.mxu0 0.0
    %1443 = vmatpush.msra.mxu0 0.0
    %1444 = vmatpush.msra.mxu0 0.0
    %1445 = vmatpush.msra.mxu0 0.0
    %1446 = vmatpush.msra.mxu0 0.0
    %1447 = vmatpush.msra.mxu0 %v1424
    %1448 = vmatpush.msra.mxu0 %v1422
    %1449 = vmatmul.f32.gmra.mxu0 %v1428
    %v1450 = vpop.f32.mrf.mxu0
    %v1451 = vadd.f32 0.0, %v1450
    %1452 = vmatmul.f32.gmra.mxu0 %v1431
    %v1453 = vpop.f32.mrf.mxu0
    %v1454 = vadd.f32 0.0, %v1453
    %1455 = vdwg.mxu0
    %1458 = vrot.lane.b32.xlu0 %v1451, 16
    %v1459 = vpop.permute.xlu0 %1458
    %1460 = vrot.lane.b32.xlu0 %v1454, 16
    %v1461 = vpop.permute.xlu0 %1460
    %1464 = vst.msk [vmem:[#allocation3] sm:$0xff] %vm619, %v1459
    %1465 = vst.msk [vmem:[#allocation3 + $0x8] sm:$0xff] %vm619, %v1461
    %1466 = vrot.lane.b32.xlu0 %v1188, 96
    %v1467 = vpop.permute.xlu0 %1466
    %1468 = vrot.lane.b32.xlu0 %v1191, 96
    %v1469 = vpop.permute.xlu0 %1468
    %1470 = vrot.lane.b32.xlu0 %v1188, 32
    %v1471 = vpop.permute.xlu0 %1470
    %1472 = vrot.lane.b32.xlu0 %v1191, 32
    %v1473 = vpop.permute.xlu0 %1472
    %v1474 = vsel %vm376, %v1467, 0
    %v1476 = vsel %vm376, %v1469, 0
    %v1478 = vsel %vm376, %v1471, 0
    %v1480 = vsel %vm376, %v1473, 0
    %1482 = vmatpush.xpose.msra.mxu0 0.0
    %1483 = vmatpush.xpose.msra.mxu0 0.0
    %1484 = vmatpush.xpose.msra.mxu0 0.0
    %1485 = vmatpush.xpose.msra.mxu0 0.0
    %1486 = vmatpush.xpose.msra.mxu0 0.0
    %1487 = vmatpush.xpose.msra.mxu0 0.0
    %1488 = vmatpush.xpose.msra.mxu0 0.0
    %1489 = vmatpush.xpose.msra.mxu0 0.0
    %1490 = vmatpush.xpose.msra.mxu0 0.0
    %1491 = vmatpush.xpose.msra.mxu0 0.0
    %1492 = vmatpush.xpose.msra.mxu0 0.0
    %1493 = vmatpush.xpose.msra.mxu0 0.0
    %1494 = vmatpush.xpose.msra.mxu0 0.0
    %1495 = vmatpush.xpose.msra.mxu0 0.0
    %1496 = vmatpush.xpose.msra.mxu0 %v1480
    %1497 = vmatpush.xpose.msra.mxu0 %v1478
    %1498 = vmatmul.f32.gmra.mxu0 %v1474
    %v1499 = vpop.f32.mrf.mxu0
    %v1500 = vadd.f32 0.0, %v1499
    %1501 = vmatmul.f32.gmra.mxu0 %v1476
    %v1502 = vpop.f32.mrf.mxu0
    %v1503 = vadd.f32 0.0, %v1502
    %1504 = vdwg.mxu0
    %v1505 = vsel %vm376, %v1500, -inf
    %1506 = vmax.xlane.f32.xlu0 %v1505
    %v1507 = vpop.xlane.xlu0 %1506
    %v1508 = vsel %vm376, %v1503, -inf
    %1509 = vmax.xlane.f32.xlu0 %v1508
    %v1510 = vpop.xlane.xlu0 %1509
    %v1511 = vsub.f32 %v1500, %v1507
    %v1512 = vsub.f32 %v1503, %v1510
    %v1513 = vmul.f32 %v1511, 1.442695
    %v1514 = vpow.pop %v1513
    %v1515 = vmul.f32 %v1512, 1.442695
    %v1516 = vpow.pop %v1515
    %v1517 = vsel %vm376, %v1514, 0.0
    %1518 = vadd.xlane.f32.xlu0 %v1517
    %v1519 = vpop.xlane.xlu0 %1518
    %v1520 = vsel %vm376, %v1516, 0.0
    %1521 = vadd.xlane.f32.xlu0 %v1520
    %v1522 = vpop.xlane.xlu0 %1521
    %v1523 = vrcp.pop %v1519
    %v1524 = vmul.f32 %v1519, %v1523
    %v1525 = vsub.f32 1.0, %v1524
    %v1526 = vmul.f32 %v1523, %v1525
    %v1527 = vadd.f32 %v1523, %v1526
    %vm1528 = vweird.f32 %v1519
    %vm1529 = vweird.f32 %v1523
    %vm1530 = vmor %vm1528, %vm1529
    %v1531 = vsel %vm1530, %v1523, %v1527
    %v1532 = vand.u32 2147483647, %v1519
    %vm1533 = vcmp.eq.f32.partialorder %v1532, 8.507059e+37
    %v1534 = vand.u32 %v1519, 2147483648
    %v1535 = vor.u32 1.1754944e-38, %v1534
    %v1536 = vsel %vm1533, %v1535, %v1531
    %v1537 = vmul.f32 %v1514, %v1536
    %v1538 = vrcp.pop %v1522
    %v1539 = vmul.f32 %v1522, %v1538
    %v1540 = vsub.f32 1.0, %v1539
    %v1541 = vmul.f32 %v1538, %v1540
    %v1542 = vadd.f32 %v1538, %v1541
    %vm1543 = vweird.f32 %v1522
    %vm1544 = vweird.f32 %v1538
    %vm1545 = vmor %vm1543, %vm1544
    %v1546 = vsel %vm1545, %v1538, %v1542
    %v1547 = vand.u32 2147483647, %v1522
    %vm1548 = vcmp.eq.f32.partialorder %v1547, 8.507059e+37
    %v1549 = vand.u32 %v1522, 2147483648
    %v1550 = vor.u32 1.1754944e-38, %v1549
    %v1551 = vsel %vm1548, %v1550, %v1546
    %v1552 = vmul.f32 %v1516, %v1551
    %1553 = vrot.lane.b32.xlu0 %v1211, 96
    %v1554 = vpop.permute.xlu0 %1553
    %1555 = vrot.lane.b32.xlu0 %v1214, 96
    %v1556 = vpop.permute.xlu0 %1555
    %v1560 = vsel %vm376, %v1537, 0
    %v1563 = vsel %vm376, %v1552, 0
    %1565 = vmatpush.msra.mxu0 0.0
    %1566 = vmatpush.msra.mxu0 0.0
    %1567 = vmatpush.msra.mxu0 0.0
    %1568 = vmatpush.msra.mxu0 0.0
    %1569 = vmatpush.msra.mxu0 0.0
    %1570 = vmatpush.msra.mxu0 0.0
    %1571 = vmatpush.msra.mxu0 0.0
    %1572 = vmatpush.msra.mxu0 0.0
    %1573 = vmatpush.msra.mxu0 0.0
    %1574 = vmatpush.msra.mxu0 0.0
    %1575 = vmatpush.msra.mxu0 0.0
    %1576 = vmatpush.msra.mxu0 0.0
    %1577 = vmatpush.msra.mxu0 0.0
    %1578 = vmatpush.msra.mxu0 0.0
    %1579 = vmatpush.msra.mxu0 %v1556
    %1580 = vmatpush.msra.mxu0 %v1554
    %1581 = vmatmul.f32.gmra.mxu0 %v1560
    %v1582 = vpop.f32.mrf.mxu0
    %v1583 = vadd.f32 0.0, %v1582
    %1584 = vmatmul.f32.gmra.mxu0 %v1563
    %v1585 = vpop.f32.mrf.mxu0
    %v1586 = vadd.f32 0.0, %v1585
    %1587 = vdwg.mxu0
    %1590 = vrot.lane.b32.xlu0 %v1583, 32
    %v1591 = vpop.permute.xlu0 %1590
    %1592 = vrot.lane.b32.xlu0 %v1586, 32
    %v1593 = vpop.permute.xlu0 %1592
    %1596 = vst.msk [vmem:[#allocation3] sm:$0xff] %vm752, %v1591
    %1597 = vst.msk [vmem:[#allocation3 + $0x8] sm:$0xff] %vm752, %v1593
    %1598 = vrot.lane.b32.xlu0 %v1188, 80
    %v1599 = vpop.permute.xlu0 %1598
    %1600 = vrot.lane.b32.xlu0 %v1191, 80
    %v1601 = vpop.permute.xlu0 %1600
    %1602 = vrot.lane.b32.xlu0 %v1188, 16
    %v1603 = vpop.permute.xlu0 %1602
    %1604 = vrot.lane.b32.xlu0 %v1191, 16
    %v1605 = vpop.permute.xlu0 %1604
    %v1606 = vsel %vm376, %v1599, 0
    %v1608 = vsel %vm376, %v1601, 0
    %v1610 = vsel %vm376, %v1603, 0
    %v1612 = vsel %vm376, %v1605, 0
    %1614 = vmatpush.xpose.msra.mxu0 0.0
    %1615 = vmatpush.xpose.msra.mxu0 0.0
    %1616 = vmatpush.xpose.msra.mxu0 0.0
    %1617 = vmatpush.xpose.msra.mxu0 0.0
    %1618 = vmatpush.xpose.msra.mxu0 0.0
    %1619 = vmatpush.xpose.msra.mxu0 0.0
    %1620 = vmatpush.xpose.msra.mxu0 0.0
    %1621 = vmatpush.xpose.msra.mxu0 0.0
    %1622 = vmatpush.xpose.msra.mxu0 0.0
    %1623 = vmatpush.xpose.msra.mxu0 0.0
    %1624 = vmatpush.xpose.msra.mxu0 0.0
    %1625 = vmatpush.xpose.msra.mxu0 0.0
    %1626 = vmatpush.xpose.msra.mxu0 0.0
    %1627 = vmatpush.xpose.msra.mxu0 0.0
    %1628 = vmatpush.xpose.msra.mxu0 %v1612
    %1629 = vmatpush.xpose.msra.mxu0 %v1610
    %1630 = vmatmul.f32.gmra.mxu0 %v1606
    %v1631 = vpop.f32.mrf.mxu0
    %v1632 = vadd.f32 0.0, %v1631
    %1633 = vmatmul.f32.gmra.mxu0 %v1608
    %v1634 = vpop.f32.mrf.mxu0
    %v1635 = vadd.f32 0.0, %v1634
    %1636 = vdwg.mxu0
    %v1637 = vsel %vm376, %v1632, -inf
    %1638 = vmax.xlane.f32.xlu0 %v1637
    %v1639 = vpop.xlane.xlu0 %1638
    %v1640 = vsel %vm376, %v1635, -inf
    %1641 = vmax.xlane.f32.xlu0 %v1640
    %v1642 = vpop.xlane.xlu0 %1641
    %v1643 = vsub.f32 %v1632, %v1639
    %v1644 = vsub.f32 %v1635, %v1642
    %v1645 = vmul.f32 %v1643, 1.442695
    %v1646 = vpow.pop %v1645
    %v1647 = vmul.f32 %v1644, 1.442695
    %v1648 = vpow.pop %v1647
    %v1649 = vsel %vm376, %v1646, 0.0
    %1650 = vadd.xlane.f32.xlu0 %v1649
    %v1651 = vpop.xlane.xlu0 %1650
    %v1652 = vsel %vm376, %v1648, 0.0
    %1653 = vadd.xlane.f32.xlu0 %v1652
    %v1654 = vpop.xlane.xlu0 %1653
    %v1655 = vrcp.pop %v1651
    %v1656 = vmul.f32 %v1651, %v1655
    %v1657 = vsub.f32 1.0, %v1656
    %v1658 = vmul.f32 %v1655, %v1657
    %v1659 = vadd.f32 %v1655, %v1658
    %vm1660 = vweird.f32 %v1651
    %vm1661 = vweird.f32 %v1655
    %vm1662 = vmor %vm1660, %vm1661
    %v1663 = vsel %vm1662, %v1655, %v1659
    %v1664 = vand.u32 2147483647, %v1651
    %vm1665 = vcmp.eq.f32.partialorder %v1664, 8.507059e+37
    %v1666 = vand.u32 %v1651, 2147483648
    %v1667 = vor.u32 1.1754944e-38, %v1666
    %v1668 = vsel %vm1665, %v1667, %v1663
    %v1669 = vmul.f32 %v1646, %v1668
    %v1670 = vrcp.pop %v1654
    %v1671 = vmul.f32 %v1654, %v1670
    %v1672 = vsub.f32 1.0, %v1671
    %v1673 = vmul.f32 %v1670, %v1672
    %v1674 = vadd.f32 %v1670, %v1673
    %vm1675 = vweird.f32 %v1654
    %vm1676 = vweird.f32 %v1670
    %vm1677 = vmor %vm1675, %vm1676
    %v1678 = vsel %vm1677, %v1670, %v1674
    %v1679 = vand.u32 2147483647, %v1654
    %vm1680 = vcmp.eq.f32.partialorder %v1679, 8.507059e+37
    %v1681 = vand.u32 %v1654, 2147483648
    %v1682 = vor.u32 1.1754944e-38, %v1681
    %v1683 = vsel %vm1680, %v1682, %v1678
    %v1684 = vmul.f32 %v1648, %v1683
    %1685 = vrot.lane.b32.xlu0 %v1211, 80
    %v1686 = vpop.permute.xlu0 %1685
    %1687 = vrot.lane.b32.xlu0 %v1214, 80
    %v1688 = vpop.permute.xlu0 %1687
    %v1692 = vsel %vm376, %v1669, 0
    %v1695 = vsel %vm376, %v1684, 0
    %1697 = vmatpush.msra.mxu0 0.0
    %1698 = vmatpush.msra.mxu0 0.0
    %1699 = vmatpush.msra.mxu0 0.0
    %1700 = vmatpush.msra.mxu0 0.0
    %1701 = vmatpush.msra.mxu0 0.0
    %1702 = vmatpush.msra.mxu0 0.0
    %1703 = vmatpush.msra.mxu0 0.0
    %1704 = vmatpush.msra.mxu0 0.0
    %1705 = vmatpush.msra.mxu0 0.0
    %1706 = vmatpush.msra.mxu0 0.0
    %1707 = vmatpush.msra.mxu0 0.0
    %1708 = vmatpush.msra.mxu0 0.0
    %1709 = vmatpush.msra.mxu0 0.0
    %1710 = vmatpush.msra.mxu0 0.0
    %1711 = vmatpush.msra.mxu0 %v1688
    %1712 = vmatpush.msra.mxu0 %v1686
    %1713 = vmatmul.f32.gmra.mxu0 %v1692
    %v1714 = vpop.f32.mrf.mxu0
    %v1715 = vadd.f32 0.0, %v1714
    %1716 = vmatmul.f32.gmra.mxu0 %v1695
    %v1717 = vpop.f32.mrf.mxu0
    %v1718 = vadd.f32 0.0, %v1717
    %1719 = vdwg.mxu0
    %1722 = vrot.lane.b32.xlu0 %v1715, 48
    %v1723 = vpop.permute.xlu0 %1722
    %1724 = vrot.lane.b32.xlu0 %v1718, 48
    %v1725 = vpop.permute.xlu0 %1724
    %1728 = vst.msk [vmem:[#allocation3] sm:$0xff] %vm885, %v1723
    %1729 = vst.msk [vmem:[#allocation3 + $0x8] sm:$0xff] %vm885, %v1725
    %v1730 = vld [vmem:[#allocation3] sm:$0xff]
    %v1731 = vld [vmem:[#allocation3 + $0x8] sm:$0xff]
    %s1732 = scalar_lea.vmem %s12, 64
    %v1733 = vld [vmem:[%s1732] sm:$0xff]
    %v1734 = vld [vmem:[%s1732 + $0x8] sm:$0xff]
    %v1735 = vld [vmem:[%s1732 + $0x10] sm:$0xff]
    %v1736 = vld [vmem:[%s1732 + $0x18] sm:$0xff]
    %v1737 = vld [vmem:[%s1732 + $0x20] sm:$0xff]
    %v1738 = vld [vmem:[%s1732 + $0x28] sm:$0xff]
    %v1739 = vld [vmem:[%s1732 + $0x30] sm:$0xff]
    %v1740 = vld [vmem:[%s1732 + $0x38] sm:$0xff]
    %s1741 = scalar_lea.vmem %s13, 1
    %v1742 = vld [vmem:[%s1741] sm:$0x1]
    %v1744 = vperm.slane %v1742, 0
    %v1747 = vsel %vm288, %v1730, 0
    %v1750 = vsel %vm288, %v1731, 0
    %1752 = vmatpush.msra.mxu0 0.0
    %1753 = vmatpush.msra.mxu0 0.0
    %1754 = vmatpush.msra.mxu0 0.0
    %1755 = vmatpush.msra.mxu0 0.0
    %1756 = vmatpush.msra.mxu0 0.0
    %1757 = vmatpush.msra.mxu0 0.0
    %1758 = vmatpush.msra.mxu0 0.0
    %1759 = vmatpush.msra.mxu0 0.0
    %1760 = vmatpush.msra.mxu0 %v1740
    %1761 = vmatpush.msra.mxu0 %v1739
    %1762 = vmatpush.msra.mxu0 %v1738
    %1763 = vmatpush.msra.mxu0 %v1737
    %1764 = vmatpush.msra.mxu0 %v1736
    %1765 = vmatpush.msra.mxu0 %v1735
    %1766 = vmatpush.msra.mxu0 %v1734
    %1767 = vmatpush.msra.mxu0 %v1733
    %1768 = vmatmul.f32.gmra.mxu0 %v1747
    %v1769 = vpop.f32.mrf.mxu0
    %v1770 = vadd.f32 %v1744, %v1769
    %1771 = vmatmul.f32.gmra.mxu0 %v1750
    %v1772 = vpop.f32.mrf.mxu0
    %v1773 = vadd.f32 %v1744, %v1772
    %1774 = vdwg.mxu0
    %v1775 = vadd.f32 %v1138, %v1770
    %v1776 = vadd.f32 %v1139, %v1773
    %s1777 = scalar_lea.vmem %s14, 1
    %v1778 = vld [vmem:[%s1777] sm:$0x1]
    %s1779 = scalar_lea.vmem [#allocation10], 1
    %v1780 = vld [vmem:[%s1779] sm:$0x1]
    %v1781 = vsel %vm288, %v1775, 0.0
    %1782 = vadd.xlane.f32.xlu0 %v1781
    %v1783 = vpop.xlane.xlu0 %1782
    %v1784 = vsel %vm288, %v1776, 0.0
    %1785 = vadd.xlane.f32.xlu0 %v1784
    %v1786 = vpop.xlane.xlu0 %1785
    %v1787 = vmul.f32 %v1783, %v947
    %v1788 = vmul.f32 %v1786, %v947
    %v1789 = vsub.f32 %v1775, %v1787
    %v1790 = vsub.f32 %v1776, %v1788
    %v1791 = vmul.f32 %v1789, %v1789
    %v1792 = vmul.f32 %v1790, %v1790
    %v1793 = vsel %vm288, %v1791, 0.0
    %1794 = vadd.xlane.f32.xlu0 %v1793
    %v1795 = vpop.xlane.xlu0 %1794
    %v1796 = vsel %vm288, %v1792, 0.0
    %1797 = vadd.xlane.f32.xlu0 %v1796
    %v1798 = vpop.xlane.xlu0 %1797
    %v1799 = vmul.f32 %v1795, %v947
    %v1800 = vmul.f32 %v1798, %v947
    %v1801 = vadd.f32 %v1799, 1e-05
    %v1802 = vadd.f32 %v1800, 1e-05
    %v1803 = vrsqrt.pop %v1801
    %v1804 = vmul.f32 %v1803, %v1801
    %v1805 = vmul.f32 %v1804, %v1803
    %v1806 = vmul.f32 0.5, %v1805
    %v1807 = vsub.f32 1.5, %v1806
    %v1808 = vmul.f32 %v1803, %v1807
    %vm1809 = vweird.f32 %v1801
    %vm1810 = vweird.f32 %v1803
    %vm1811 = vmor %vm1809, %vm1810
    %v1812 = vsel %vm1811, %v1803, %v1808
    %v1813 = vrsqrt.pop %v1802
    %v1814 = vmul.f32 %v1813, %v1802
    %v1815 = vmul.f32 %v1814, %v1813
    %v1816 = vmul.f32 0.5, %v1815
    %v1817 = vsub.f32 1.5, %v1816
    %v1818 = vmul.f32 %v1813, %v1817
    %vm1819 = vweird.f32 %v1802
    %vm1820 = vweird.f32 %v1813
    %vm1821 = vmor %vm1819, %vm1820
    %v1822 = vsel %vm1821, %v1813, %v1818
    %v1823 = vmul.f32 %v1789, %v1812
    %v1824 = vmul.f32 %v1790, %v1822
    %v1826 = vperm.slane %v1778, 0
    %v1828 = vmul.f32 %v1823, %v1826
    %v1829 = vmul.f32 %v1824, %v1826
    %v1831 = vperm.slane %v1780, 0
    %v1833 = vadd.f32 %v1828, %v1831
    %v1834 = vadd.f32 %v1829, %v1831
    %s1835 = scalar_lea.vmem [#allocation12], 64
    %v1836 = vld [vmem:[%s1835] sm:$0xff]
    %v1837 = vld [vmem:[%s1835 + $0x8] sm:$0xff]
    %v1838 = vld [vmem:[%s1835 + $0x10] sm:$0xff]
    %v1839 = vld [vmem:[%s1835 + $0x18] sm:$0xff]
    %v1840 = vld [vmem:[%s1835 + $0x20] sm:$0xff]
    %v1841 = vld [vmem:[%s1835 + $0x28] sm:$0xff]
    %v1842 = vld [vmem:[%s1835 + $0x30] sm:$0xff]
    %v1843 = vld [vmem:[%s1835 + $0x38] sm:$0xff]
    %s1844 = scalar_lea.vmem [#allocation13], 1
    %v1845 = vld [vmem:[%s1844] sm:$0x1]
    %v1847 = vperm.slane %v1845, 0
    %v1850 = vsel %vm288, %v1833, 0
    %v1853 = vsel %vm288, %v1834, 0
    %1855 = vmatpush.msra.mxu0 0.0
    %1856 = vmatpush.msra.mxu0 0.0
    %1857 = vmatpush.msra.mxu0 0.0
    %1858 = vmatpush.msra.mxu0 0.0
    %1859 = vmatpush.msra.mxu0 0.0
    %1860 = vmatpush.msra.mxu0 0.0
    %1861 = vmatpush.msra.mxu0 0.0
    %1862 = vmatpush.msra.mxu0 0.0
    %1863 = vmatpush.msra.mxu0 %v1843
    %1864 = vmatpush.msra.mxu0 %v1842
    %1865 = vmatpush.msra.mxu0 %v1841
    %1866 = vmatpush.msra.mxu0 %v1840
    %1867 = vmatpush.msra.mxu0 %v1839
    %1868 = vmatpush.msra.mxu0 %v1838
    %1869 = vmatpush.msra.mxu0 %v1837
    %1870 = vmatpush.msra.mxu0 %v1836
    %1871 = vmatmul.f32.gmra.mxu0 %v1850
    %v1872 = vpop.f32.mrf.mxu0
    %v1873 = vadd.f32 %v1847, %v1872
    %1874 = vmatmul.f32.gmra.mxu0 %v1853
    %v1875 = vpop.f32.mrf.mxu0
    %v1876 = vadd.f32 %v1847, %v1875
    %1877 = vdwg.mxu0
    %v1878 = vmax.f32 %v1873, 0.0
    %v1879 = vmax.f32 %v1876, 0.0
    %s1880 = scalar_lea.vmem %s18, 128
    %v1881 = vld [vmem:[%s1880] sm:$0xff]
    %v1882 = vld [vmem:[%s1880 + $0x8] sm:$0xff]
    %v1883 = vld [vmem:[%s1880 + $0x10] sm:$0xff]
    %v1884 = vld [vmem:[%s1880 + $0x18] sm:$0xff]
    %v1885 = vld [vmem:[%s1880 + $0x20] sm:$0xff]
    %v1886 = vld [vmem:[%s1880 + $0x28] sm:$0xff]
    %v1887 = vld [vmem:[%s1880 + $0x30] sm:$0xff]
    %v1888 = vld [vmem:[%s1880 + $0x38] sm:$0xff]
    %v1889 = vld [vmem:[%s1880 + $0x40] sm:$0xff]
    %v1890 = vld [vmem:[%s1880 + $0x48] sm:$0xff]
    %v1891 = vld [vmem:[%s1880 + $0x50] sm:$0xff]
    %v1892 = vld [vmem:[%s1880 + $0x58] sm:$0xff]
    %v1893 = vld [vmem:[%s1880 + $0x60] sm:$0xff]
    %v1894 = vld [vmem:[%s1880 + $0x68] sm:$0xff]
    %v1895 = vld [vmem:[%s1880 + $0x70] sm:$0xff]
    %v1896 = vld [vmem:[%s1880 + $0x78] sm:$0xff]
    %s1897 = scalar_lea.vmem [#allocation15], 1
    %v1898 = vld [vmem:[%s1897] sm:$0x1]
    %v1900 = vperm.slane %v1898, 0
    %1902 = vmatpush.msra.mxu0 %v1896
    %1903 = vmatpush.msra.mxu0 %v1895
    %1904 = vmatpush.msra.mxu0 %v1894
    %1905 = vmatpush.msra.mxu0 %v1893
    %1906 = vmatpush.msra.mxu0 %v1892
    %1907 = vmatpush.msra.mxu0 %v1891
    %1908 = vmatpush.msra.mxu0 %v1890
    %1909 = vmatpush.msra.mxu0 %v1889
    %1910 = vmatpush.msra.mxu0 %v1888
    %1911 = vmatpush.msra.mxu0 %v1887
    %1912 = vmatpush.msra.mxu0 %v1886
    %1913 = vmatpush.msra.mxu0 %v1885
    %1914 = vmatpush.msra.mxu0 %v1884
    %1915 = vmatpush.msra.mxu0 %v1883
    %1916 = vmatpush.msra.mxu0 %v1882
    %1917 = vmatpush.msra.mxu0 %v1881
    %1918 = vmatmul.f32.gmra.mxu0 %v1878
    %v1919 = vpop.f32.mrf.mxu0
    %v1920 = vadd.f32 %v1900, %v1919
    %1921 = vmatmul.f32.gmra.mxu0 %v1879
    %v1922 = vpop.f32.mrf.mxu0
    %v1923 = vadd.f32 %v1900, %v1922
    %1924 = vdwg.mxu0
    %v1925 = vadd.f32 %v1833, %v1920
    %v1926 = vadd.f32 %v1834, %v1923
    %s1927 = scalar_lea.vmem %s20, 1
    %v1928 = vld [vmem:[%s1927] sm:$0x1]
    %s1929 = scalar_lea.vmem %s21, 1
    %v1930 = vld [vmem:[%s1929] sm:$0x1]
    %v1931 = vsel %vm288, %v1925, 0.0
    %1932 = vadd.xlane.f32.xlu0 %v1931
    %v1933 = vpop.xlane.xlu0 %1932
    %v1934 = vsel %vm288, %v1926, 0.0
    %1935 = vadd.xlane.f32.xlu0 %v1934
    %v1936 = vpop.xlane.xlu0 %1935
    %v1937 = vmul.f32 %v1933, %v947
    %v1938 = vmul.f32 %v1936, %v947
    %v1939 = vsub.f32 %v1925, %v1937
    %v1940 = vsub.f32 %v1926, %v1938
    %v1941 = vmul.f32 %v1939, %v1939
    %v1942 = vmul.f32 %v1940, %v1940
    %v1943 = vsel %vm288, %v1941, 0.0
    %1944 = vadd.xlane.f32.xlu0 %v1943
    %v1945 = vpop.xlane.xlu0 %1944
    %v1946 = vsel %vm288, %v1942, 0.0
    %1947 = vadd.xlane.f32.xlu0 %v1946
    %v1948 = vpop.xlane.xlu0 %1947
    %v1949 = vmul.f32 %v1945, %v947
    %v1950 = vmul.f32 %v1948, %v947
    %v1951 = vadd.f32 %v1949, 1e-05
    %v1952 = vadd.f32 %v1950, 1e-05
    %v1953 = vrsqrt.pop %v1951
    %v1954 = vmul.f32 %v1953, %v1951
    %v1955 = vmul.f32 %v1954, %v1953
    %v1956 = vmul.f32 0.5, %v1955
    %v1957 = vsub.f32 1.5, %v1956
    %v1958 = vmul.f32 %v1953, %v1957
    %vm1959 = vweird.f32 %v1951
    %vm1960 = vweird.f32 %v1953
    %vm1961 = vmor %vm1959, %vm1960
    %v1962 = vsel %vm1961, %v1953, %v1958
    %v1963 = vrsqrt.pop %v1952
    %v1964 = vmul.f32 %v1963, %v1952
    %v1965 = vmul.f32 %v1964, %v1963
    %v1966 = vmul.f32 0.5, %v1965
    %v1967 = vsub.f32 1.5, %v1966
    %v1968 = vmul.f32 %v1963, %v1967
    %vm1969 = vweird.f32 %v1952
    %vm1970 = vweird.f32 %v1963
    %vm1971 = vmor %vm1969, %vm1970
    %v1972 = vsel %vm1971, %v1963, %v1968
    %v1973 = vmul.f32 %v1939, %v1962
    %v1974 = vmul.f32 %v1940, %v1972
    %v1976 = vperm.slane %v1928, 0
    %v1978 = vmul.f32 %v1973, %v1976
    %v1979 = vmul.f32 %v1974, %v1976
    %v1981 = vperm.slane %v1930, 0
    %v1983 = vadd.f32 %v1978, %v1981
    %v1984 = vadd.f32 %v1979, %v1981
    %v1985 = vld [vmem:[%s22] sm:$0xff]
    %v1986 = vld [vmem:[%s22 + $0x8] sm:$0xff]
    %v1987 = vld [vmem:[%s22 + $0x10] sm:$0xff]
    %v1988 = vld [vmem:[%s22 + $0x18] sm:$0xff]
    %v1989 = vld [vmem:[%s22 + $0x20] sm:$0xff]
    %v1990 = vld [vmem:[%s22 + $0x28] sm:$0xff]
    %v1991 = vld [vmem:[%s22 + $0x30] sm:$0xff]
    %v1992 = vld [vmem:[%s22 + $0x38] sm:$0xff]
    %v1993 = vld [vmem:[#allocation4] sm:$0x1]
    %v1995 = vperm.slane %v1993, 0
    %v1998 = vsel %vm288, %v1983, 0
    %v2001 = vsel %vm288, %v1984, 0
    %2003 = vmatpush.msra.mxu0 0.0
    %2004 = vmatpush.msra.mxu0 0.0
    %2005 = vmatpush.msra.mxu0 0.0
    %2006 = vmatpush.msra.mxu0 0.0
    %2007 = vmatpush.msra.mxu0 0.0
    %2008 = vmatpush.msra.mxu0 0.0
    %2009 = vmatpush.msra.mxu0 0.0
    %2010 = vmatpush.msra.mxu0 0.0
    %2011 = vmatpush.msra.mxu0 %v1992
    %2012 = vmatpush.msra.mxu0 %v1991
    %2013 = vmatpush.msra.mxu0 %v1990
    %2014 = vmatpush.msra.mxu0 %v1989
    %2015 = vmatpush.msra.mxu0 %v1988
    %2016 = vmatpush.msra.mxu0 %v1987
    %2017 = vmatpush.msra.mxu0 %v1986
    %2018 = vmatpush.msra.mxu0 %v1985
    %2019 = vmatmul.f32.gmra.mxu0 %v1998
    %v2020 = vpop.f32.mrf.mxu0
    %v2021 = vadd.f32 %v1995, %v2020
    %2022 = vmatmul.f32.gmra.mxu0 %v2001
    %v2023 = vpop.f32.mrf.mxu0
    %v2024 = vadd.f32 %v1995, %v2023
    %2025 = vdwg.mxu0
    %vm2026 = vcmask 7168
    %2027 = vst.msk [vmem:[%s24] sm:$0xff] %vm2026, %v2021
    %2028 = vst.msk [vmem:[%s24 + $0x8] sm:$0xff] %vm2026, %v2024
    // Predicated region
    $region126: #{scheduling_transformer_forward.1} parent=1 // pred_check
      _
    $region127: #{scheduling_transformer_forward.1} parent=1 // pred_check_branch
      %2030 = sbr.rel (0) target = $region129
    $region128: #{scheduling_transformer_forward.1} parent=1 // pred_region
      _
    $region129: #{scheduling_transformer_forward.1} parent=1 // pred_fallthru
      _
    // Predicated region
    $region130: #{scheduling_transformer_forward.1} parent=1 // pred_check
      _
    $region131: #{scheduling_transformer_forward.1} parent=1 // pred_check_branch
      %2032 = sbr.rel (0) target = $region133
    $region132: #{scheduling_transformer_forward.1} parent=1 // pred_region
      _
    $region133: #{scheduling_transformer_forward.1} parent=1 // pred_fallthru
      _
    %2033 = vsyncpa [#allocation6], 1
    %2034 = vsyncpa [#allocation8], 1
    %2035 = vsyncpa [#allocation11], 1
    %2036 = vsyncpa [#allocation14], 1

</llo_original>
